<compile_context>
chip_gen: v7x
topology: tpu7x:2x2x1
jax: 0.10.0
libtpu: 0.0.40
codegen_flags: <defaults>
</compile_context>

<pallas_src>
import functools

import jax
import jax.numpy as jnp
from jax.experimental import pallas as pl
from jax.experimental.pallas import tpu as pltpu

EPS = 1e-6
_FFN_CHUNK = 512          # lane width of one FFN 4H chunk (multiple of 128)


# ---------------------------------------------------------------------------
# Kernel
# ---------------------------------------------------------------------------
def _layernorm(h, gamma, beta, n_feat, approx_recip):
    # MCAN/visdialch LayerNorm: gamma*(x-mu)/(std+eps)+beta, unbiased (ddof=1) std.
    mu = jnp.mean(h, axis=-1, keepdims=True)
    var = jnp.sum((h - mu) ** 2, axis=-1, keepdims=True) * (1.0 / (n_feat - 1))
    inv = pl.reciprocal(jnp.sqrt(var) + EPS, approx=approx_recip)
    return gamma * (h - mu) * inv + beta


def up_kernel(x_ref, adj_ref,
              w1_ref, b1_ref, w2_ref, b2_ref,
              g1_ref, be1_ref, g2_ref, be2_ref,
              out_ref, *, compute_dtype, ffn_chunk, approx_recip):
    x = x_ref[...]                                   # (TB, N, H) f32 (residual/LN path)
    TB, N, H = x.shape
    x_c = x.astype(compute_dtype)                    # single cast; no-op in the f32 path

    # output = adj @ x.  adj already arrives in compute_dtype (pre-cast in wrapper);
    # batched MXU matmul with f32 accumulation.
    agg = jnp.einsum('bij,bjh->bih', adj_ref[...], x_c,
                     preferred_element_type=jnp.float32)

    # residual + LayerNorm1 (dropout == identity).  Fold the batch tile into the
    # row dimension so the FFN matmuls see TB*N rows on the MXU at once.
    h = _layernorm((x + agg).reshape(TB * N, H),
                   g1_ref[...], be1_ref[...], H, approx_recip)
    h_c = h.astype(compute_dtype)

    # FFN: Linear(H,4H) -> ReLU -> Linear(4H,H), chunked over the 4H axis so the
    # full (rows, 4H) f32 intermediate (and its bf16 copy) never materializes.
    M = w1_ref.shape[1]
    acc = jnp.zeros((TB * N, H), jnp.float32)
    for c0 in range(0, M, ffn_chunk):                # static, unrolled; static slices
        cw = min(ffn_chunk, M - c0)
        mid = jnp.dot(h_c, w1_ref[:, c0:c0 + cw],
                      preferred_element_type=jnp.float32) + b1_ref[:, c0:c0 + cw]
        mid = jnp.maximum(mid, 0.0).astype(compute_dtype)
        acc = acc + jnp.dot(mid, w2_ref[c0:c0 + cw, :],
                            preferred_element_type=jnp.float32)

    # residual + LayerNorm2 (fold the second Linear's bias in here).
    out = _layernorm(h + acc + b2_ref[...], g2_ref[...], be2_ref[...], H, approx_recip)
    out_ref[...] = out.reshape(TB, N, H).astype(out_ref.dtype)


# ---------------------------------------------------------------------------
# Wrapper
# ---------------------------------------------------------------------------
def _vmem_capacity_bytes():
    try:
        return int(pltpu.get_tpu_info().vmem_capacity_bytes)
    except Exception:
        return 64 << 20        # conservative fallback (v7x-sized) if query fails


def _choose_batch_tile(B, N, H, *, adj_itemsize, ffn_chunk, budget, rows_target):
    """Largest useful batch tile: enough rows to feed the MXU, bounded by the
    per-step VMEM budget, and (when B >= 2) at least two grid steps so the
    "parallel" batch axis can shard across v7x's two TensorCores."""
    def tile_bytes(tb):
        rows = tb * N
        io = rows * 2 * H * 4 + tb * N * N * adj_itemsize      # x + out (f32) + adj
        live = 3 * rows * H * 4 + rows * ffn_chunk * 4         # agg/h/acc f32 + 1 FFN chunk
        return 2 * io + live                                   # double-buffered I/O + live temps

    divs = [d for d in range(1, B + 1) if B % d == 0 and tile_bytes(d) <= budget]
    if not divs:
        return 1
    if B >= 2:                                                 # keep >= 2 grid steps
        two_step = [d for d in divs if B // d >= 2]
        divs = two_step if two_step else divs[:1]
    for d in divs:                                             # smallest tile reaching
        if d * N >= rows_target:                               # the MXU row target
            return d
    return divs[-1]                                            # else biggest that fits


def up_forward(x, adj, params, *, use_bf16=True):
    """x: (B, N, H) float32, adj: (B, N, N) float32."""
    orig_N = x.shape[1]
    # Keep the node axis sublane-aligned so the in-kernel (TB,N,H)->(TB*N,H)
    # reshape is a free view; zero-padded node rows are sliced off afterwards.
    pad_n = (-orig_N) % 8
    if pad_n:
        x = jnp.pad(x, ((0, 0), (0, pad_n), (0, 0)))
        adj = jnp.pad(adj, ((0, 0), (0, pad_n), (0, pad_n)))
    B, N, H = x.shape
    M = 4 * H
    # TODO(synk): H that is not a multiple of 128 leaves output stores lane-sparse;
    # padding H would change the LayerNorm statistics unless masked, so it is left
    # to the caller (visdialch hidden sizes like 512/1024 are already aligned).

    w1, b1, w2, b2, g1, be1, g2, be2 = params
    compute_dtype = jnp.bfloat16 if use_bf16 else jnp.float32
    approx_recip = bool(use_bf16)

    # Pre-cast the big operands once in the wrapper: halves FFN-weight and adj
    # HBM->VMEM DMA traffic / VMEM residency and removes in-kernel cast passes.
    w1c = w1.astype(compute_dtype)
    w2c = w2.astype(compute_dtype)
    adjc = adj.astype(compute_dtype)

    itemsize = jnp.dtype(compute_dtype).itemsize
    weight_bytes = (w1c.size + w2c.size) * itemsize
    param_bytes = (b1.size + b2.size + g1.size + be1.size + g2.size + be2.size) * 4

    vmem_cap = _vmem_capacity_bytes()
    rows_target = 512 if vmem_cap >= (96 << 20) else 256      # v5e/v6e vs v7x-class
    ffn_chunk = min(M, _FFN_CHUNK)

    # Budget for the pipelined per-step tensors: physical VMEM minus resident
    # params (worst case: still double-buffered) minus headroom.
    budget = max(vmem_cap - 2 * (weight_bytes + param_bytes) - (12 << 20), 8 << 20)
    TB = _choose_batch_tile(B, N, H, adj_itemsize=itemsize, ffn_chunk=ffn_chunk,
                            budget=budget, rows_target=rows_target)
    grid = (B // TB,)

    rows = TB * N
    io_tile = rows * 2 * H * 4 + TB * N * N * itemsize
    live = 3 * rows * H * 4 + rows * ffn_chunk * 4
    vmem_needed = 2 * io_tile + live + 2 * (weight_bytes + param_bytes) + (4 << 20)
    # Generation-aware cap: never ask for more than physical VMEM (64 MiB on v7x).
    vmem_limit = int(min(max(vmem_needed, 32 << 20), vmem_cap - (8 << 20)))

    flops = B * (2 * N * N * H + 4 * N * H * M)
    bytes_accessed = (2 * x.size * 4 + adjc.size * itemsize
                      + weight_bytes + param_bytes)

    def build(single_buffer_consts):
        def const_spec(shape):
            # Constant-index blocks never change between grid steps; single
            # buffering halves their VMEM residency (decisive inside v7x's 64 MiB).
            if single_buffer_consts:
                return pl.BlockSpec(shape, lambda b: (0, 0),
                                    pipeline_mode=pl.Buffered(1))
            return pl.BlockSpec(shape, lambda b: (0, 0))

        return pl.pallas_call(
            functools.partial(up_kernel, compute_dtype=compute_dtype,
                              ffn_chunk=ffn_chunk, approx_recip=approx_recip),
            out_shape=jax.ShapeDtypeStruct((B, N, H), x.dtype),
            grid_spec=pltpu.PrefetchScalarGridSpec(
                num_scalar_prefetch=0,
                grid=grid,
                in_specs=[
                    pl.BlockSpec((TB, N, H), lambda b: (b, 0, 0)),   # x
                    pl.BlockSpec((TB, N, N), lambda b: (b, 0, 0)),   # adj (compute dtype)
                    const_spec((H, M)),    # w1
                    const_spec((1, M)),    # b1
                    const_spec((M, H)),    # w2
                    const_spec((1, H)),    # b2
                    const_spec((1, H)),    # gamma1
                    const_spec((1, H)),    # beta1
                    const_spec((1, H)),    # gamma2
                    const_spec((1, H)),    # beta2
                ],
                out_specs=pl.BlockSpec((TB, N, H), lambda b: (b, 0, 0)),
            ),
            compiler_params=pltpu.CompilerParams(
                dimension_semantics=("parallel",),
                vmem_limit_bytes=vmem_limit),
            cost_estimate=pl.CostEstimate(
                flops=int(flops), transcendentals=0,
                bytes_accessed=int(bytes_accessed)),
        )

    args = (x, adjc, w1c, b1, w2c, b2, g1, be1, g2, be2)
    try:
        out = build(single_buffer_consts=True)(*args)
        out = jax.block_until_ready(out)
    except Exception:
        # pipeline_mode=pl.Buffered(1) unsupported on this jax version/backend;
        # fall back to default (double-buffered) constant blocks.
        out = build(single_buffer_consts=False)(*args)

    if pad_n:
        out = out[:, :orig_N, :]
    return out


# ---------------------------------------------------------------------------
# Params / reference
# ---------------------------------------------------------------------------
def init_params(key, hidden_size):
    H = hidden_size
    M = 4 * H
    k1, k2 = jax.random.split(key)
    w1 = jax.random.normal(k1, (H, M), jnp.float32) * (1.0 / jnp.sqrt(H))
    b1 = jnp.zeros((1, M), jnp.float32)
    w2 = jax.random.normal(k2, (M, H), jnp.float32) * (1.0 / jnp.sqrt(M))
    b2 = jnp.zeros((1, H), jnp.float32)
    g1 = jnp.ones((1, H), jnp.float32)
    be1 = jnp.zeros((1, H), jnp.float32)
    g2 = jnp.ones((1, H), jnp.float32)
    be2 = jnp.zeros((1, H), jnp.float32)
    return (w1, b1, w2, b2, g1, be1, g2, be2)


def up_reference(x, adj, params):
    """Pure-JAX reference mirroring the PyTorch forward (eval mode)."""
    w1, b1, w2, b2, g1, be1, g2, be2 = params

    def ln(h, g, b):
        H = h.shape[-1]
        mu = jnp.mean(h, axis=-1, keepdims=True)
        var = jnp.sum((h - mu) ** 2, axis=-1, keepdims=True) / (H - 1)
        return g * (h - mu) / (jnp.sqrt(var) + EPS) + b

    out = jnp.einsum("bij,bjh->bih", adj, x)
    h = ln(x + out, g1, be1)
    mid = jnp.maximum(h @ w1 + b1, 0.0)
    f = mid @ w2 + b2
    return ln(h + f, g2, be2)


if __name__ == "__main__":
    # TODO(synk): nn.Dropout is treated as identity (eval-mode forward); there is
    # no deterministic stochastic-dropout equivalent required here.
    B, N, H = 2, 8, 32
    key = jax.random.PRNGKey(0)
    kx, ka, kp = jax.random.split(key, 3)

    x = jax.random.normal(kx, (B, N, H), jnp.float32)
    adj_logits = jax.random.normal(ka, (B, N, N), jnp.float32)
    adj = jax.nn.softmax(adj_logits, axis=-1)   # row-normalized adjacency

    params = init_params(kp, H)
    ref = up_reference(x, adj, params)

    # Strict-precision path (f32 MXU inputs, exact reciprocal) verifies semantics.
    out_f32 = jax.block_until_ready(up_forward(x, adj, params, use_bf16=False))
    assert out_f32.shape == (B, N, H)
    err_f32 = float(jnp.max(jnp.abs(out_f32 - ref)))
    assert jnp.allclose(out_f32, ref, atol=1e-4, rtol=1e-4), err_f32

    # Fast path: bf16 MXU inputs, f32 accumulation, f32 LayerNorm statistics.
    out_bf16 = jax.block_until_ready(up_forward(x, adj, params, use_bf16=True))
    assert out_bf16.shape == (B, N, H)
    err_bf16 = float(jnp.max(jnp.abs(out_bf16 - ref)))
    assert jnp.allclose(out_bf16, ref, atol=1e-1, rtol=1e-1), err_bf16

    print("KERNEL_OK")
</pallas_src>

<mosaic_0001>
module attributes {stable_mosaic.version = 11 : i64} {
  func.func @up_kernel(%arg0: i32, %arg1: memref<1x8x32xf32, #tpu.memory_space<vmem>>, %arg2: memref<1x8x8xf32, #tpu.memory_space<vmem>>, %arg3: memref<32x128xf32, #tpu.memory_space<vmem>>, %arg4: memref<1x128xf32, #tpu.memory_space<vmem>>, %arg5: memref<128x32xf32, #tpu.memory_space<vmem>>, %arg6: memref<1x32xf32, #tpu.memory_space<vmem>>, %arg7: memref<1x32xf32, #tpu.memory_space<vmem>>, %arg8: memref<1x32xf32, #tpu.memory_space<vmem>>, %arg9: memref<1x32xf32, #tpu.memory_space<vmem>>, %arg10: memref<1x32xf32, #tpu.memory_space<vmem>>, %arg11: memref<1x8x32xf32, #tpu.memory_space<vmem>>) attributes {dimension_semantics = [#tpu.dimension_semantics<parallel>], iteration_bounds = array<i64: 2>, scalar_prefetch = 0 : i64, scratch_operands = 0 : i64, tpu.core_type = #tpu.core_type<tc>, window_params = [{transform_indices = @transform_0, window_bounds = array<i64: 1, 8, 32>}, {transform_indices = @transform_1, window_bounds = array<i64: 1, 8, 8>}, {pipeline_mode = #tpu.pipeline_mode<synchronous>, transform_indices = @transform_2, window_bounds = array<i64: 32, 128>}, {pipeline_mode = #tpu.pipeline_mode<synchronous>, transform_indices = @transform_3, window_bounds = array<i64: 1, 128>}, {pipeline_mode = #tpu.pipeline_mode<synchronous>, transform_indices = @transform_4, window_bounds = array<i64: 128, 32>}, {pipeline_mode = #tpu.pipeline_mode<synchronous>, transform_indices = @transform_5, window_bounds = array<i64: 1, 32>}, {pipeline_mode = #tpu.pipeline_mode<synchronous>, transform_indices = @transform_6, window_bounds = array<i64: 1, 32>}, {pipeline_mode = #tpu.pipeline_mode<synchronous>, transform_indices = @transform_7, window_bounds = array<i64: 1, 32>}, {pipeline_mode = #tpu.pipeline_mode<synchronous>, transform_indices = @transform_8, window_bounds = array<i64: 1, 32>}, {pipeline_mode = #tpu.pipeline_mode<synchronous>, transform_indices = @transform_9, window_bounds = array<i64: 1, 32>}, {transform_indices = @transform_10, window_bounds = array<i64: 1, 8, 32>}]} {
    %c0 = arith.constant 0 : index
    %c0_0 = arith.constant 0 : index
    %c0_1 = arith.constant 0 : index
    %0 = vector.load %arg1[%c0, %c0_0, %c0_1] : memref<1x8x32xf32, #tpu.memory_space<vmem>>, vector<1x8x32xf32>
    %c0_2 = arith.constant 0 : index
    %c0_3 = arith.constant 0 : index
    %c0_4 = arith.constant 0 : index
    %1 = vector.load %arg2[%c0_2, %c0_3, %c0_4] : memref<1x8x8xf32, #tpu.memory_space<vmem>>, vector<1x8x8xf32>
    "tpu.trace_start"() <{level = 10 : i32, message = "bij,bjh->bih"}> : () -> ()
    %cst = arith.constant dense<0.000000e+00> : vector<1x8x32xf32>
    %2 = tpu.matmul %1, %0, %cst {dimension_numbers = #tpu.dot_dimension_numbers<[2], [1], [1], [2], [0, 0, 0, 1, 1, 2], [0], [0]>} : vector<1x8x8xf32>, vector<1x8x32xf32>, vector<1x8x32xf32> -> vector<1x8x32xf32>
    "tpu.trace_stop"() : () -> ()
    %3 = arith.addf %0, %2 : vector<1x8x32xf32>
    %4 = vector.shape_cast %3 : vector<1x8x32xf32> to vector<8x32xf32>
    %c0_5 = arith.constant 0 : index
    %c0_6 = arith.constant 0 : index
    %5 = vector.load %arg7[%c0_5, %c0_6] : memref<1x32xf32, #tpu.memory_space<vmem>>, vector<1x32xf32>
    %c0_7 = arith.constant 0 : index
    %c0_8 = arith.constant 0 : index
    %6 = vector.load %arg8[%c0_7, %c0_8] : memref<1x32xf32, #tpu.memory_space<vmem>>, vector<1x32xf32>
    %cst_9 = arith.constant dense<0.000000e+00> : vector<8xf32>
    %7 = vector.multi_reduction <add>, %4, %cst_9 [1] : vector<8x32xf32> to vector<8xf32>
    %8 = vector.shape_cast %7 : vector<8xf32> to vector<8x1xf32>
    %cst_10 = arith.constant 3.200000e+01 : f32
    %9 = vector.broadcast %cst_10 : f32 to vector<8x1xf32>
    %10 = arith.divf %8, %9 : vector<8x1xf32>
    %11 = vector.broadcast %10 : vector<8x1xf32> to vector<8x32xf32>
    %12 = arith.subf %4, %11 : vector<8x32xf32>
    %13 = arith.mulf %12, %12 : vector<8x32xf32>
    %cst_11 = arith.constant dense<0.000000e+00> : vector<8xf32>
    %14 = vector.multi_reduction <add>, %13, %cst_11 [1] : vector<8x32xf32> to vector<8xf32>
    %15 = vector.shape_cast %14 : vector<8xf32> to vector<8x1xf32>
    %cst_12 = arith.constant 0.0322580636 : f32
    %16 = vector.broadcast %cst_12 : f32 to vector<8x1xf32>
    %17 = arith.mulf %15, %16 : vector<8x1xf32>
    %18 = math.sqrt %17 : vector<8x1xf32>
    %cst_13 = arith.constant 9.99999997E-7 : f32
    %19 = vector.broadcast %cst_13 : f32 to vector<8x1xf32>
    %20 = arith.addf %18, %19 : vector<8x1xf32>
    %21 = tpu.reciprocal %20 : vector<8x1xf32> -> vector<8x1xf32>
    %22 = vector.broadcast %10 : vector<8x1xf32> to vector<8x32xf32>
    %23 = arith.subf %4, %22 : vector<8x32xf32>
    %24 = vector.broadcast %5 : vector<1x32xf32> to vector<8x32xf32>
    %25 = arith.mulf %24, %23 : vector<8x32xf32>
    %26 = vector.broadcast %21 : vector<8x1xf32> to vector<8x32xf32>
    %27 = arith.mulf %25, %26 : vector<8x32xf32>
    %28 = vector.broadcast %6 : vector<1x32xf32> to vector<8x32xf32>
    %29 = arith.addf %27, %28 : vector<8x32xf32>
    %cst_14 = arith.constant 0.000000e+00 : f32
    %30 = vector.broadcast %cst_14 : f32 to vector<8x32xf32>
    %c0_15 = arith.constant 0 : index
    %c0_16 = arith.constant 0 : index
    %31 = vector.load %arg3[%c0_15, %c0_16] : memref<32x128xf32, #tpu.memory_space<vmem>>, vector<32x128xf32>
    %cst_17 = arith.constant dense<0.000000e+00> : vector<8x128xf32>
    %32 = tpu.matmul %29, %31, %cst_17 {dimension_numbers = #tpu.dot_dimension_numbers<[1], [0], [0], [1], [0, 0, 1, 1], [], []>} : vector<8x32xf32>, vector<32x128xf32>, vector<8x128xf32> -> vector<8x128xf32>
    %c0_18 = arith.constant 0 : index
    %c0_19 = arith.constant 0 : index
    %33 = vector.load %arg4[%c0_18, %c0_19] : memref<1x128xf32, #tpu.memory_space<vmem>>, vector<1x128xf32>
    %34 = vector.broadcast %33 : vector<1x128xf32> to vector<8x128xf32>
    %35 = arith.addf %32, %34 : vector<8x128xf32>
    %cst_20 = arith.constant 0.000000e+00 : f32
    %36 = vector.broadcast %cst_20 : f32 to vector<8x128xf32>
    %37 = arith.maximumf %35, %36 : vector<8x128xf32>
    %c0_21 = arith.constant 0 : index
    %c0_22 = arith.constant 0 : index
    %38 = vector.load %arg5[%c0_21, %c0_22] : memref<128x32xf32, #tpu.memory_space<vmem>>, vector<128x32xf32>
    %cst_23 = arith.constant dense<0.000000e+00> : vector<8x32xf32>
    %39 = tpu.matmul %37, %38, %cst_23 {dimension_numbers = #tpu.dot_dimension_numbers<[1], [0], [0], [1], [0, 0, 1, 1], [], []>} : vector<8x128xf32>, vector<128x32xf32>, vector<8x32xf32> -> vector<8x32xf32>
    %40 = arith.addf %30, %39 : vector<8x32xf32>
    %41 = arith.addf %29, %40 : vector<8x32xf32>
    %c0_24 = arith.constant 0 : index
    %c0_25 = arith.constant 0 : index
    %42 = vector.load %arg6[%c0_24, %c0_25] : memref<1x32xf32, #tpu.memory_space<vmem>>, vector<1x32xf32>
    %43 = vector.broadcast %42 : vector<1x32xf32> to vector<8x32xf32>
    %44 = arith.addf %41, %43 : vector<8x32xf32>
    %c0_26 = arith.constant 0 : index
    %c0_27 = arith.constant 0 : index
    %45 = vector.load %arg9[%c0_26, %c0_27] : memref<1x32xf32, #tpu.memory_space<vmem>>, vector<1x32xf32>
    %c0_28 = arith.constant 0 : index
    %c0_29 = arith.constant 0 : index
    %46 = vector.load %arg10[%c0_28, %c0_29] : memref<1x32xf32, #tpu.memory_space<vmem>>, vector<1x32xf32>
    %cst_30 = arith.constant dense<0.000000e+00> : vector<8xf32>
    %47 = vector.multi_reduction <add>, %44, %cst_30 [1] : vector<8x32xf32> to vector<8xf32>
    %48 = vector.shape_cast %47 : vector<8xf32> to vector<8x1xf32>
    %cst_31 = arith.constant 3.200000e+01 : f32
    %49 = vector.broadcast %cst_31 : f32 to vector<8x1xf32>
    %50 = arith.divf %48, %49 : vector<8x1xf32>
    %51 = vector.broadcast %50 : vector<8x1xf32> to vector<8x32xf32>
    %52 = arith.subf %44, %51 : vector<8x32xf32>
    %53 = arith.mulf %52, %52 : vector<8x32xf32>
    %cst_32 = arith.constant dense<0.000000e+00> : vector<8xf32>
    %54 = vector.multi_reduction <add>, %53, %cst_32 [1] : vector<8x32xf32> to vector<8xf32>
    %55 = vector.shape_cast %54 : vector<8xf32> to vector<8x1xf32>
    %cst_33 = arith.constant 0.0322580636 : f32
    %56 = vector.broadcast %cst_33 : f32 to vector<8x1xf32>
    %57 = arith.mulf %55, %56 : vector<8x1xf32>
    %58 = math.sqrt %57 : vector<8x1xf32>
    %cst_34 = arith.constant 9.99999997E-7 : f32
    %59 = vector.broadcast %cst_34 : f32 to vector<8x1xf32>
    %60 = arith.addf %58, %59 : vector<8x1xf32>
    %61 = tpu.reciprocal %60 : vector<8x1xf32> -> vector<8x1xf32>
    %62 = vector.broadcast %50 : vector<8x1xf32> to vector<8x32xf32>
    %63 = arith.subf %44, %62 : vector<8x32xf32>
    %64 = vector.broadcast %45 : vector<1x32xf32> to vector<8x32xf32>
    %65 = arith.mulf %64, %63 : vector<8x32xf32>
    %66 = vector.broadcast %61 : vector<8x1xf32> to vector<8x32xf32>
    %67 = arith.mulf %65, %66 : vector<8x32xf32>
    %68 = vector.broadcast %46 : vector<1x32xf32> to vector<8x32xf32>
    %69 = arith.addf %67, %68 : vector<8x32xf32>
    %70 = vector.shape_cast %69 : vector<8x32xf32> to vector<1x8x32xf32>
    %c0_35 = arith.constant 0 : index
    %c0_36 = arith.constant 0 : index
    %c0_37 = arith.constant 0 : index
    %71 = vector.load %arg11[%c0_35, %c0_36, %c0_37] : memref<1x8x32xf32, #tpu.memory_space<vmem>>, vector<1x8x32xf32>
    tpu.vector_store %arg11[%c0_35, %c0_36, %c0_37], %70 {strides = array<i32>} : memref<1x8x32xf32, #tpu.memory_space<vmem>>, vector<1x8x32xf32>,
    return
  }
  func.func @transform_0(%arg0: i32) -> (i32, i32, i32) {
    %c0_i32 = arith.constant 0 : i32
    %c0_i32_0 = arith.constant 0 : i32
    %c0_i32_1 = arith.constant 0 : i32
    return %arg0, %c0_i32, %c0_i32_0 : i32, i32, i32
  }
  func.func @transform_1(%arg0: i32) -> (i32, i32, i32) {
    %c0_i32 = arith.constant 0 : i32
    %c0_i32_0 = arith.constant 0 : i32
    %c0_i32_1 = arith.constant 0 : i32
    return %arg0, %c0_i32, %c0_i32_0 : i32, i32, i32
  }
  func.func @transform_2(%arg0: i32) -> (i32, i32) {
    %c0_i32 = arith.constant 0 : i32
    %c0_i32_0 = arith.constant 0 : i32
    %c0_i32_1 = arith.constant 0 : i32
    return %c0_i32, %c0_i32_0 : i32, i32
  }
  func.func @transform_3(%arg0: i32) -> (i32, i32) {
    %c0_i32 = arith.constant 0 : i32
    %c0_i32_0 = arith.constant 0 : i32
    %c0_i32_1 = arith.constant 0 : i32
    return %c0_i32, %c0_i32_0 : i32, i32
  }
  func.func @transform_4(%arg0: i32) -> (i32, i32) {
    %c0_i32 = arith.constant 0 : i32
    %c0_i32_0 = arith.constant 0 : i32
    %c0_i32_1 = arith.constant 0 : i32
    return %c0_i32, %c0_i32_0 : i32, i32
  }
  func.func @transform_5(%arg0: i32) -> (i32, i32) {
    %c0_i32 = arith.constant 0 : i32
    %c0_i32_0 = arith.constant 0 : i32
    %c0_i32_1 = arith.constant 0 : i32
    return %c0_i32, %c0_i32_0 : i32, i32
  }
  func.func @transform_6(%arg0: i32) -> (i32, i32) {
    %c0_i32 = arith.constant 0 : i32
    %c0_i32_0 = arith.constant 0 : i32
    %c0_i32_1 = arith.constant 0 : i32
    return %c0_i32, %c0_i32_0 : i32, i32
  }
  func.func @transform_7(%arg0: i32) -> (i32, i32) {
    %c0_i32 = arith.constant 0 : i32
    %c0_i32_0 = arith.constant 0 : i32
    %c0_i32_1 = arith.constant 0 : i32
    return %c0_i32, %c0_i32_0 : i32, i32
  }
  func.func @transform_8(%arg0: i32) -> (i32, i32) {
    %c0_i32 = arith.constant 0 : i32
    %c0_i32_0 = arith.constant 0 : i32
    %c0_i32_1 = arith.constant 0 : i32
    return %c0_i32, %c0_i32_0 : i32, i32
  }
  func.func @transform_9(%arg0: i32) -> (i32, i32) {
    %c0_i32 = arith.constant 0 : i32
    %c0_i32_0 = arith.constant 0 : i32
    %c0_i32_1 = arith.constant 0 : i32
    return %c0_i32, %c0_i32_0 : i32, i32
  }
  func.func @transform_10(%arg0: i32) -> (i32, i32, i32) {
    %c0_i32 = arith.constant 0 : i32
    %c0_i32_0 = arith.constant 0 : i32
    %c0_i32_1 = arith.constant 0 : i32
    return %arg0, %c0_i32, %c0_i32_0 : i32, i32, i32
  }
}

module attributes {stable_mosaic.version = 11 : i64} {
  func.func @up_kernel(%arg0: i32, %arg1: memref<1x8x32xf32, #tpu.memory_space<vmem>>, %arg2: memref<1x8x8xf32, #tpu.memory_space<vmem>>, %arg3: memref<32x128xf32, #tpu.memory_space<vmem>>, %arg4: memref<1x128xf32, #tpu.memory_space<vmem>>, %arg5: memref<128x32xf32, #tpu.memory_space<vmem>>, %arg6: memref<1x32xf32, #tpu.memory_space<vmem>>, %arg7: memref<1x32xf32, #tpu.memory_space<vmem>>, %arg8: memref<1x32xf32, #tpu.memory_space<vmem>>, %arg9: memref<1x32xf32, #tpu.memory_space<vmem>>, %arg10: memref<1x32xf32, #tpu.memory_space<vmem>>, %arg11: memref<1x8x32xf32, #tpu.memory_space<vmem>>) attributes {dimension_semantics = [#tpu.dimension_semantics<parallel>], iteration_bounds = array<i64: 2>, scalar_prefetch = 0 : i64, scratch_operands = 0 : i64, tpu.core_type = #tpu.core_type<tc>, window_params = [{transform_indices = @transform_0, window_bounds = array<i64: 1, 8, 32>}, {transform_indices = @transform_1, window_bounds = array<i64: 1, 8, 8>}, {pipeline_mode = #tpu.pipeline_mode<synchronous>, transform_indices = @transform_2, window_bounds = array<i64: 32, 128>}, {pipeline_mode = #tpu.pipeline_mode<synchronous>, transform_indices = @transform_3, window_bounds = array<i64: 1, 128>}, {pipeline_mode = #tpu.pipeline_mode<synchronous>, transform_indices = @transform_4, window_bounds = array<i64: 128, 32>}, {pipeline_mode = #tpu.pipeline_mode<synchronous>, transform_indices = @transform_5, window_bounds = array<i64: 1, 32>}, {pipeline_mode = #tpu.pipeline_mode<synchronous>, transform_indices = @transform_6, window_bounds = array<i64: 1, 32>}, {pipeline_mode = #tpu.pipeline_mode<synchronous>, transform_indices = @transform_7, window_bounds = array<i64: 1, 32>}, {pipeline_mode = #tpu.pipeline_mode<synchronous>, transform_indices = @transform_8, window_bounds = array<i64: 1, 32>}, {pipeline_mode = #tpu.pipeline_mode<synchronous>, transform_indices = @transform_9, window_bounds = array<i64: 1, 32>}, {transform_indices = @transform_10, window_bounds = array<i64: 1, 8, 32>}]} {
    %c0 = arith.constant 0 : index
    %c0_0 = arith.constant 0 : index
    %c0_1 = arith.constant 0 : index
    %0 = vector.load %arg1[%c0, %c0_0, %c0_1] : memref<1x8x32xf32, #tpu.memory_space<vmem>>, vector<1x8x32xf32>
    %c0_2 = arith.constant 0 : index
    %c0_3 = arith.constant 0 : index
    %c0_4 = arith.constant 0 : index
    %1 = vector.load %arg2[%c0_2, %c0_3, %c0_4] : memref<1x8x8xf32, #tpu.memory_space<vmem>>, vector<1x8x8xf32>
    "tpu.trace_start"() <{level = 10 : i32, message = "bij,bjh->bih"}> : () -> ()
    %cst = arith.constant dense<0.000000e+00> : vector<1x8x32xf32>
    %2 = tpu.matmul %1, %0, %cst {dimension_numbers = #tpu.dot_dimension_numbers<[2], [1], [1], [2], [0, 0, 0, 1, 1, 2], [0], [0]>} : vector<1x8x8xf32>, vector<1x8x32xf32>, vector<1x8x32xf32> -> vector<1x8x32xf32>
    "tpu.trace_stop"() : () -> ()
    %3 = arith.addf %0, %2 : vector<1x8x32xf32>
    %4 = vector.shape_cast %3 : vector<1x8x32xf32> to vector<8x32xf32>
    %c0_5 = arith.constant 0 : index
    %c0_6 = arith.constant 0 : index
    %5 = vector.load %arg7[%c0_5, %c0_6] : memref<1x32xf32, #tpu.memory_space<vmem>>, vector<1x32xf32>
    %c0_7 = arith.constant 0 : index
    %c0_8 = arith.constant 0 : index
    %6 = vector.load %arg8[%c0_7, %c0_8] : memref<1x32xf32, #tpu.memory_space<vmem>>, vector<1x32xf32>
    %cst_9 = arith.constant dense<0.000000e+00> : vector<8xf32>
    %7 = vector.multi_reduction <add>, %4, %cst_9 [1] : vector<8x32xf32> to vector<8xf32>
    %8 = vector.shape_cast %7 : vector<8xf32> to vector<8x1xf32>
    %cst_10 = arith.constant 3.200000e+01 : f32
    %9 = vector.broadcast %cst_10 : f32 to vector<8x1xf32>
    %10 = arith.divf %8, %9 : vector<8x1xf32>
    %11 = vector.broadcast %10 : vector<8x1xf32> to vector<8x32xf32>
    %12 = arith.subf %4, %11 : vector<8x32xf32>
    %13 = arith.mulf %12, %12 : vector<8x32xf32>
    %cst_11 = arith.constant dense<0.000000e+00> : vector<8xf32>
    %14 = vector.multi_reduction <add>, %13, %cst_11 [1] : vector<8x32xf32> to vector<8xf32>
    %15 = vector.shape_cast %14 : vector<8xf32> to vector<8x1xf32>
    %cst_12 = arith.constant 0.0322580636 : f32
    %16 = vector.broadcast %cst_12 : f32 to vector<8x1xf32>
    %17 = arith.mulf %15, %16 : vector<8x1xf32>
    %18 = math.sqrt %17 : vector<8x1xf32>
    %cst_13 = arith.constant 9.99999997E-7 : f32
    %19 = vector.broadcast %cst_13 : f32 to vector<8x1xf32>
    %20 = arith.addf %18, %19 : vector<8x1xf32>
    %21 = tpu.reciprocal %20 : vector<8x1xf32> -> vector<8x1xf32>
    %22 = vector.broadcast %10 : vector<8x1xf32> to vector<8x32xf32>
    %23 = arith.subf %4, %22 : vector<8x32xf32>
    %24 = vector.broadcast %5 : vector<1x32xf32> to vector<8x32xf32>
    %25 = arith.mulf %24, %23 : vector<8x32xf32>
    %26 = vector.broadcast %21 : vector<8x1xf32> to vector<8x32xf32>
    %27 = arith.mulf %25, %26 : vector<8x32xf32>
    %28 = vector.broadcast %6 : vector<1x32xf32> to vector<8x32xf32>
    %29 = arith.addf %27, %28 : vector<8x32xf32>
    %cst_14 = arith.constant 0.000000e+00 : f32
    %30 = vector.broadcast %cst_14 : f32 to vector<8x32xf32>
    %c0_15 = arith.constant 0 : index
    %c0_16 = arith.constant 0 : index
    %31 = vector.load %arg3[%c0_15, %c0_16] : memref<32x128xf32, #tpu.memory_space<vmem>>, vector<32x128xf32>
    %cst_17 = arith.constant dense<0.000000e+00> : vector<8x128xf32>
    %32 = tpu.matmul %29, %31, %cst_17 {dimension_numbers = #tpu.dot_dimension_numbers<[1], [0], [0], [1], [0, 0, 1, 1], [], []>} : vector<8x32xf32>, vector<32x128xf32>, vector<8x128xf32> -> vector<8x128xf32>
    %c0_18 = arith.constant 0 : index
    %c0_19 = arith.constant 0 : index
    %33 = vector.load %arg4[%c0_18, %c0_19] : memref<1x128xf32, #tpu.memory_space<vmem>>, vector<1x128xf32>
    %34 = vector.broadcast %33 : vector<1x128xf32> to vector<8x128xf32>
    %35 = arith.addf %32, %34 : vector<8x128xf32>
    %cst_20 = arith.constant 0.000000e+00 : f32
    %36 = vector.broadcast %cst_20 : f32 to vector<8x128xf32>
    %37 = arith.maximumf %35, %36 : vector<8x128xf32>
    %c0_21 = arith.constant 0 : index
    %c0_22 = arith.constant 0 : index
    %38 = vector.load %arg5[%c0_21, %c0_22] : memref<128x32xf32, #tpu.memory_space<vmem>>, vector<128x32xf32>
    %cst_23 = arith.constant dense<0.000000e+00> : vector<8x32xf32>
    %39 = tpu.matmul %37, %38, %cst_23 {dimension_numbers = #tpu.dot_dimension_numbers<[1], [0], [0], [1], [0, 0, 1, 1], [], []>} : vector<8x128xf32>, vector<128x32xf32>, vector<8x32xf32> -> vector<8x32xf32>
    %40 = arith.addf %30, %39 : vector<8x32xf32>
    %41 = arith.addf %29, %40 : vector<8x32xf32>
    %c0_24 = arith.constant 0 : index
    %c0_25 = arith.constant 0 : index
    %42 = vector.load %arg6[%c0_24, %c0_25] : memref<1x32xf32, #tpu.memory_space<vmem>>, vector<1x32xf32>
    %43 = vector.broadcast %42 : vector<1x32xf32> to vector<8x32xf32>
    %44 = arith.addf %41, %43 : vector<8x32xf32>
    %c0_26 = arith.constant 0 : index
    %c0_27 = arith.constant 0 : index
    %45 = vector.load %arg9[%c0_26, %c0_27] : memref<1x32xf32, #tpu.memory_space<vmem>>, vector<1x32xf32>
    %c0_28 = arith.constant 0 : index
    %c0_29 = arith.constant 0 : index
    %46 = vector.load %arg10[%c0_28, %c0_29] : memref<1x32xf32, #tpu.memory_space<vmem>>, vector<1x32xf32>
    %cst_30 = arith.constant dense<0.000000e+00> : vector<8xf32>
    %47 = vector.multi_reduction <add>, %44, %cst_30 [1] : vector<8x32xf32> to vector<8xf32>
    %48 = vector.shape_cast %47 : vector<8xf32> to vector<8x1xf32>
    %cst_31 = arith.constant 3.200000e+01 : f32
    %49 = vector.broadcast %cst_31 : f32 to vector<8x1xf32>
    %50 = arith.divf %48, %49 : vector<8x1xf32>
    %51 = vector.broadcast %50 : vector<8x1xf32> to vector<8x32xf32>
    %52 = arith.subf %44, %51 : vector<8x32xf32>
    %53 = arith.mulf %52, %52 : vector<8x32xf32>
    %cst_32 = arith.constant dense<0.000000e+00> : vector<8xf32>
    %54 = vector.multi_reduction <add>, %53, %cst_32 [1] : vector<8x32xf32> to vector<8xf32>
    %55 = vector.shape_cast %54 : vector<8xf32> to vector<8x1xf32>
    %cst_33 = arith.constant 0.0322580636 : f32
    %56 = vector.broadcast %cst_33 : f32 to vector<8x1xf32>
    %57 = arith.mulf %55, %56 : vector<8x1xf32>
    %58 = math.sqrt %57 : vector<8x1xf32>
    %cst_34 = arith.constant 9.99999997E-7 : f32
    %59 = vector.broadcast %cst_34 : f32 to vector<8x1xf32>
    %60 = arith.addf %58, %59 : vector<8x1xf32>
    %61 = tpu.reciprocal %60 : vector<8x1xf32> -> vector<8x1xf32>
    %62 = vector.broadcast %50 : vector<8x1xf32> to vector<8x32xf32>
    %63 = arith.subf %44, %62 : vector<8x32xf32>
    %64 = vector.broadcast %45 : vector<1x32xf32> to vector<8x32xf32>
    %65 = arith.mulf %64, %63 : vector<8x32xf32>
    %66 = vector.broadcast %61 : vector<8x1xf32> to vector<8x32xf32>
    %67 = arith.mulf %65, %66 : vector<8x32xf32>
    %68 = vector.broadcast %46 : vector<1x32xf32> to vector<8x32xf32>
    %69 = arith.addf %67, %68 : vector<8x32xf32>
    %70 = vector.shape_cast %69 : vector<8x32xf32> to vector<1x8x32xf32>
    %c0_35 = arith.constant 0 : index
    %c0_36 = arith.constant 0 : index
    %c0_37 = arith.constant 0 : index
    %71 = vector.load %arg11[%c0_35, %c0_36, %c0_37] : memref<1x8x32xf32, #tpu.memory_space<vmem>>, vector<1x8x32xf32>
    tpu.vector_store %arg11[%c0_35, %c0_36, %c0_37], %70 {strides = array<i32>} : memref<1x8x32xf32, #tpu.memory_space<vmem>>, vector<1x8x32xf32>,
    return
  }
  func.func @transform_0(%arg0: i32) -> (i32, i32, i32) {
    %c0_i32 = arith.constant 0 : i32
    %c0_i32_0 = arith.constant 0 : i32
    %c0_i32_1 = arith.constant 0 : i32
    return %arg0, %c0_i32, %c0_i32_0 : i32, i32, i32
  }
  func.func @transform_1(%arg0: i32) -> (i32, i32, i32) {
    %c0_i32 = arith.constant 0 : i32
    %c0_i32_0 = arith.constant 0 : i32
    %c0_i32_1 = arith.constant 0 : i32
    return %arg0, %c0_i32, %c0_i32_0 : i32, i32, i32
  }
  func.func @transform_2(%arg0: i32) -> (i32, i32) {
    %c0_i32 = arith.constant 0 : i32
    %c0_i32_0 = arith.constant 0 : i32
    %c0_i32_1 = arith.constant 0 : i32
    return %c0_i32, %c0_i32_0 : i32, i32
  }
  func.func @transform_3(%arg0: i32) -> (i32, i32) {
    %c0_i32 = arith.constant 0 : i32
    %c0_i32_0 = arith.constant 0 : i32
    %c0_i32_1 = arith.constant 0 : i32
    return %c0_i32, %c0_i32_0 : i32, i32
  }
  func.func @transform_4(%arg0: i32) -> (i32, i32) {
    %c0_i32 = arith.constant 0 : i32
    %c0_i32_0 = arith.constant 0 : i32
    %c0_i32_1 = arith.constant 0 : i32
    return %c0_i32, %c0_i32_0 : i32, i32
  }
  func.func @transform_5(%arg0: i32) -> (i32, i32) {
    %c0_i32 = arith.constant 0 : i32
    %c0_i32_0 = arith.constant 0 : i32
    %c0_i32_1 = arith.constant 0 : i32
    return %c0_i32, %c0_i32_0 : i32, i32
  }
  func.func @transform_6(%arg0: i32) -> (i32, i32) {
    %c0_i32 = arith.constant 0 : i32
    %c0_i32_0 = arith.constant 0 : i32
    %c0_i32_1 = arith.constant 0 : i32
    return %c0_i32, %c0_i32_0 : i32, i32
  }
  func.func @transform_7(%arg0: i32) -> (i32, i32) {
    %c0_i32 = arith.constant 0 : i32
    %c0_i32_0 = arith.constant 0 : i32
    %c0_i32_1 = arith.constant 0 : i32
    return %c0_i32, %c0_i32_0 : i32, i32
  }
  func.func @transform_8(%arg0: i32) -> (i32, i32) {
    %c0_i32 = arith.constant 0 : i32
    %c0_i32_0 = arith.constant 0 : i32
    %c0_i32_1 = arith.constant 0 : i32
    return %c0_i32, %c0_i32_0 : i32, i32
  }
  func.func @transform_9(%arg0: i32) -> (i32, i32) {
    %c0_i32 = arith.constant 0 : i32
    %c0_i32_0 = arith.constant 0 : i32
    %c0_i32_1 = arith.constant 0 : i32
    return %c0_i32, %c0_i32_0 : i32, i32
  }
  func.func @transform_10(%arg0: i32) -> (i32, i32, i32) {
    %c0_i32 = arith.constant 0 : i32
    %c0_i32_0 = arith.constant 0 : i32
    %c0_i32_1 = arith.constant 0 : i32
    return %arg0, %c0_i32, %c0_i32_0 : i32, i32, i32
  }
}

</mosaic_0001>

<llo_original>
// kernel: tpu_custom_call.1
$region0: #{tpu_custom_call.1}
  #allocation0 [shape = 'u32[]', space=smem, size = 0x4, offset = 0x4, fixed_abs, tag = 'smem constant byte address 0x4 - core index']
  #allocation1 [shape = 'u32[144,128]{1,0:T(1,128)}', space=vmem, size = 0x12000, scoped, tag = 'internal scratch']
  %s0 = inlined_call_operand.vmem [shape: f32[2,8,32], index: 0, kind: input, shape index: {}]
  %s1 = inlined_call_operand.vmem [shape: f32[2,8,8], index: 1, kind: input, shape index: {}]
  %s2 = inlined_call_operand.vmem [shape: f32[32,128], index: 2, kind: input, shape index: {}]
  %s3 = inlined_call_operand.vmem [shape: f32[1,128], index: 3, kind: input, shape index: {}]
  %s4 = inlined_call_operand.vmem [shape: f32[128,32], index: 4, kind: input, shape index: {}]
  %s5 = inlined_call_operand.vmem [shape: f32[1,32], index: 5, kind: input, shape index: {}]
  %s6 = inlined_call_operand.vmem [shape: f32[1,32], index: 6, kind: input, shape index: {}]
  %s7 = inlined_call_operand.vmem [shape: f32[1,32], index: 7, kind: input, shape index: {}]
  %s8 = inlined_call_operand.vmem [shape: f32[1,32], index: 8, kind: input, shape index: {}]
  %s9 = inlined_call_operand.vmem [shape: f32[1,32], index: 9, kind: input, shape index: {}]
  %s10 = inlined_call_operand.hbm [shape: f32[2,8,32], index: 10, kind: output, shape index: {}]
  %s11 = sld [smem:[#allocation0]]
  $region73: #{tpu_custom_call.1} parent=0
    _
  %s13 = ssub.s32 1, %s11
  %s14 = scalar_select 0, %s13, %s11
  $region1: #{tpu_custom_call.1} parent=0
    #allocation2 [shape = 'u8[8192]{0}', space=vmem, size = 0x2000, scoped, tag = 'output window, operand 0']
    #allocation3 [shape = 's32[2]{0}', space=sflag, size = 0x8, scoped, tag = 'scoped memory for tpu_custom_call.1']
    %15 = vsyncpa [#allocation3], 0
    %s16 = scalar_lea.sflag [#allocation3], 1
    %17 = vsyncpa %s16, 0
    loop: start=0, step=1, limit=4
    $region2: #{tpu_custom_call.1} parent=1 // loop_pre_header
      _
    $region3: #{tpu_custom_call.1} parent=1 // loop_header
      %s19 = sphi 0, %s23
      %p20 = scmp.ge.s32.totalorder %s19, 4
      %s29 = sphi 0, %s31
      %s32 = sphi 0, %s29
      %s33 = sphi 0, %s32
      %s49 = sphi 0, %s33
      %s55 = sphi 0, %s57
      %s58 = sphi 0, %s55
      %s59 = sphi 0, %s58
      %s75 = sphi 0, %s59
      %s79 = sphi 0, %s79
      %s81 = sphi 0, %s79
      %s82 = sphi 0, %s81
      %s96 = sphi 0, %s82
      %s100 = sphi 0, %s100
      %s102 = sphi 0, %s100
      %s103 = sphi 0, %s102
      %s117 = sphi 0, %s103
      %s121 = sphi 0, %s121
      %s123 = sphi 0, %s121
      %s124 = sphi 0, %s123
      %s138 = sphi 0, %s124
      %s142 = sphi 0, %s142
      %s144 = sphi 0, %s142
      %s145 = sphi 0, %s144
      %s159 = sphi 0, %s145
      %s163 = sphi 0, %s163
      %s165 = sphi 0, %s163
      %s166 = sphi 0, %s165
      %s180 = sphi 0, %s166
      %s184 = sphi 0, %s184
      %s186 = sphi 0, %s184
      %s187 = sphi 0, %s186
      %s201 = sphi 0, %s187
      %s205 = sphi 0, %s205
      %s207 = sphi 0, %s205
      %s208 = sphi 0, %s207
      %s222 = sphi 0, %s208
      %s226 = sphi 0, %s226
      %s228 = sphi 0, %s226
      %s229 = sphi 0, %s228
      %s243 = sphi 0, %s229
      %s249 = sphi 0, %s251
      %s252 = sphi 0, %s249
      %s253 = sphi 0, %s252
      %s269 = sphi 0, %s253
    $region4: #{tpu_custom_call.1} parent=1 // loop_header_branch
      %22 = sbr.rel (%p20) target = $region8
    $region5: #{tpu_custom_call.1} parent=1 // loop_body
      %s24 = ssub.s32 %s19, 1
      %s25 = ssub.s32 %s19, 2
      %s26 = sadd.s32 %s19, 1
      %s27 = ssub.s32 %s19, %s26
      %p28 = scmp.eq.s32.totalorder %s27, 0
      %s30 = sadd.s32 %s29, 1
      %s31 = scalar_select %p28, %s29, %s30
      %p34 = pneg %p28
      %p35 = scmp.eq.s32.totalorder %s19, 1
      %p36 = por %p34, %p35
      %p37 = scmp.ne.s32.totalorder %s29, %s32
      %p38 = scmp.eq.s32.totalorder %s19, 0
      %p39 = por %p37, %p38
      %p40 = scmp.ne.s32.totalorder %s29, %s32
      %p41 = scmp.eq.s32.totalorder %s24, 1
      %p42 = por %p40, %p41
      %p43 = scmp.ne.s32.totalorder %s32, %s33
      %p44 = scmp.eq.s32.totalorder %s24, 0
      %p45 = por %p43, %p44
      %p46 = scmp.ne.s32.totalorder %s32, %s33
      %p47 = scmp.eq.s32.totalorder %s25, 1
      %p48 = por %p46, %p47
      %p50 = scmp.ne.s32.totalorder %s33, %s49
      %p51 = scmp.eq.s32.totalorder %s25, 0
      %p52 = por %p50, %p51
      %s53 = ssub.s32 %s19, %s26
      %p54 = scmp.eq.s32.totalorder %s53, 0
      %s56 = sadd.s32 %s55, 1
      %s57 = scalar_select %p54, %s55, %s56
      %p60 = pneg %p54
      %p61 = scmp.eq.s32.totalorder %s19, 1
      %p62 = por %p60, %p61
      %p63 = scmp.ne.s32.totalorder %s55, %s58
      %p64 = scmp.eq.s32.totalorder %s19, 0
      %p65 = por %p63, %p64
      %p66 = scmp.ne.s32.totalorder %s55, %s58
      %p67 = scmp.eq.s32.totalorder %s24, 1
      %p68 = por %p66, %p67
      %p69 = scmp.ne.s32.totalorder %s58, %s59
      %p70 = scmp.eq.s32.totalorder %s24, 0
      %p71 = por %p69, %p70
      %p72 = scmp.ne.s32.totalorder %s58, %s59
      %p73 = scmp.eq.s32.totalorder %s25, 1
      %p74 = por %p72, %p73
      %p76 = scmp.ne.s32.totalorder %s59, %s75
      %p77 = scmp.eq.s32.totalorder %s25, 0
      %p78 = por %p76, %p77
      %s80 = sadd.s32 %s79, 1
      %p83 = scmp.eq.s32.totalorder %s19, 1
      %p84 = scmp.ne.s32.totalorder %s79, %s81
      %p85 = scmp.eq.s32.totalorder %s19, 0
      %p86 = por %p84, %p85
      %p87 = scmp.ne.s32.totalorder %s79, %s81
      %p88 = scmp.eq.s32.totalorder %s24, 1
      %p89 = por %p87, %p88
      %p90 = scmp.ne.s32.totalorder %s81, %s82
      %p91 = scmp.eq.s32.totalorder %s24, 0
      %p92 = por %p90, %p91
      %p93 = scmp.ne.s32.totalorder %s81, %s82
      %p94 = scmp.eq.s32.totalorder %s25, 1
      %p95 = por %p93, %p94
      %p97 = scmp.ne.s32.totalorder %s82, %s96
      %p98 = scmp.eq.s32.totalorder %s25, 0
      %p99 = por %p97, %p98
      %s101 = sadd.s32 %s100, 1
      %p104 = scmp.eq.s32.totalorder %s19, 1
      %p105 = scmp.ne.s32.totalorder %s100, %s102
      %p106 = scmp.eq.s32.totalorder %s19, 0
      %p107 = por %p105, %p106
      %p108 = scmp.ne.s32.totalorder %s100, %s102
      %p109 = scmp.eq.s32.totalorder %s24, 1
      %p110 = por %p108, %p109
      %p111 = scmp.ne.s32.totalorder %s102, %s103
      %p112 = scmp.eq.s32.totalorder %s24, 0
      %p113 = por %p111, %p112
      %p114 = scmp.ne.s32.totalorder %s102, %s103
      %p115 = scmp.eq.s32.totalorder %s25, 1
      %p116 = por %p114, %p115
      %p118 = scmp.ne.s32.totalorder %s103, %s117
      %p119 = scmp.eq.s32.totalorder %s25, 0
      %p120 = por %p118, %p119
      %s122 = sadd.s32 %s121, 1
      %p125 = scmp.eq.s32.totalorder %s19, 1
      %p126 = scmp.ne.s32.totalorder %s121, %s123
      %p127 = scmp.eq.s32.totalorder %s19, 0
      %p128 = por %p126, %p127
      %p129 = scmp.ne.s32.totalorder %s121, %s123
      %p130 = scmp.eq.s32.totalorder %s24, 1
      %p131 = por %p129, %p130
      %p132 = scmp.ne.s32.totalorder %s123, %s124
      %p133 = scmp.eq.s32.totalorder %s24, 0
      %p134 = por %p132, %p133
      %p135 = scmp.ne.s32.totalorder %s123, %s124
      %p136 = scmp.eq.s32.totalorder %s25, 1
      %p137 = por %p135, %p136
      %p139 = scmp.ne.s32.totalorder %s124, %s138
      %p140 = scmp.eq.s32.totalorder %s25, 0
      %p141 = por %p139, %p140
      %s143 = sadd.s32 %s142, 1
      %p146 = scmp.eq.s32.totalorder %s19, 1
      %p147 = scmp.ne.s32.totalorder %s142, %s144
      %p148 = scmp.eq.s32.totalorder %s19, 0
      %p149 = por %p147, %p148
      %p150 = scmp.ne.s32.totalorder %s142, %s144
      %p151 = scmp.eq.s32.totalorder %s24, 1
      %p152 = por %p150, %p151
      %p153 = scmp.ne.s32.totalorder %s144, %s145
      %p154 = scmp.eq.s32.totalorder %s24, 0
      %p155 = por %p153, %p154
      %p156 = scmp.ne.s32.totalorder %s144, %s145
      %p157 = scmp.eq.s32.totalorder %s25, 1
      %p158 = por %p156, %p157
      %p160 = scmp.ne.s32.totalorder %s145, %s159
      %p161 = scmp.eq.s32.totalorder %s25, 0
      %p162 = por %p160, %p161
      %s164 = sadd.s32 %s163, 1
      %p167 = scmp.eq.s32.totalorder %s19, 1
      %p168 = scmp.ne.s32.totalorder %s163, %s165
      %p169 = scmp.eq.s32.totalorder %s19, 0
      %p170 = por %p168, %p169
      %p171 = scmp.ne.s32.totalorder %s163, %s165
      %p172 = scmp.eq.s32.totalorder %s24, 1
      %p173 = por %p171, %p172
      %p174 = scmp.ne.s32.totalorder %s165, %s166
      %p175 = scmp.eq.s32.totalorder %s24, 0
      %p176 = por %p174, %p175
      %p177 = scmp.ne.s32.totalorder %s165, %s166
      %p178 = scmp.eq.s32.totalorder %s25, 1
      %p179 = por %p177, %p178
      %p181 = scmp.ne.s32.totalorder %s166, %s180
      %p182 = scmp.eq.s32.totalorder %s25, 0
      %p183 = por %p181, %p182
      %s185 = sadd.s32 %s184, 1
      %p188 = scmp.eq.s32.totalorder %s19, 1
      %p189 = scmp.ne.s32.totalorder %s184, %s186
      %p190 = scmp.eq.s32.totalorder %s19, 0
      %p191 = por %p189, %p190
      %p192 = scmp.ne.s32.totalorder %s184, %s186
      %p193 = scmp.eq.s32.totalorder %s24, 1
      %p194 = por %p192, %p193
      %p195 = scmp.ne.s32.totalorder %s186, %s187
      %p196 = scmp.eq.s32.totalorder %s24, 0
      %p197 = por %p195, %p196
      %p198 = scmp.ne.s32.totalorder %s186, %s187
      %p199 = scmp.eq.s32.totalorder %s25, 1
      %p200 = por %p198, %p199
      %p202 = scmp.ne.s32.totalorder %s187, %s201
      %p203 = scmp.eq.s32.totalorder %s25, 0
      %p204 = por %p202, %p203
      %s206 = sadd.s32 %s205, 1
      %p209 = scmp.eq.s32.totalorder %s19, 1
      %p210 = scmp.ne.s32.totalorder %s205, %s207
      %p211 = scmp.eq.s32.totalorder %s19, 0
      %p212 = por %p210, %p211
      %p213 = scmp.ne.s32.totalorder %s205, %s207
      %p214 = scmp.eq.s32.totalorder %s24, 1
      %p215 = por %p213, %p214
      %p216 = scmp.ne.s32.totalorder %s207, %s208
      %p217 = scmp.eq.s32.totalorder %s24, 0
      %p218 = por %p216, %p217
      %p219 = scmp.ne.s32.totalorder %s207, %s208
      %p220 = scmp.eq.s32.totalorder %s25, 1
      %p221 = por %p219, %p220
      %p223 = scmp.ne.s32.totalorder %s208, %s222
      %p224 = scmp.eq.s32.totalorder %s25, 0
      %p225 = por %p223, %p224
      %s227 = sadd.s32 %s226, 1
      %p230 = scmp.eq.s32.totalorder %s19, 1
      %p231 = scmp.ne.s32.totalorder %s226, %s228
      %p232 = scmp.eq.s32.totalorder %s19, 0
      %p233 = por %p231, %p232
      %p234 = scmp.ne.s32.totalorder %s226, %s228
      %p235 = scmp.eq.s32.totalorder %s24, 1
      %p236 = por %p234, %p235
      %p237 = scmp.ne.s32.totalorder %s228, %s229
      %p238 = scmp.eq.s32.totalorder %s24, 0
      %p239 = por %p237, %p238
      %p240 = scmp.ne.s32.totalorder %s228, %s229
      %p241 = scmp.eq.s32.totalorder %s25, 1
      %p242 = por %p240, %p241
      %p244 = scmp.ne.s32.totalorder %s229, %s243
      %p245 = scmp.eq.s32.totalorder %s25, 0
      %p246 = por %p244, %p245
      %s247 = ssub.s32 %s19, %s26
      %p248 = scmp.eq.s32.totalorder %s247, 0
      %s250 = sadd.s32 %s249, 1
      %s251 = scalar_select %p248, %s249, %s250
      %p254 = pneg %p248
      %p255 = scmp.eq.s32.totalorder %s19, 1
      %p256 = por %p254, %p255
      %p257 = scmp.ne.s32.totalorder %s249, %s252
      %p258 = scmp.eq.s32.totalorder %s19, 0
      %p259 = por %p257, %p258
      %p260 = scmp.ne.s32.totalorder %s249, %s252
      %p261 = scmp.eq.s32.totalorder %s24, 1
      %p262 = por %p260, %p261
      %p263 = scmp.ne.s32.totalorder %s252, %s253
      %p264 = scmp.eq.s32.totalorder %s24, 0
      %p265 = por %p263, %p264
      %p266 = scmp.ne.s32.totalorder %s252, %s253
      %p267 = scmp.eq.s32.totalorder %s25, 1
      %p268 = por %p266, %p267
      %p270 = scmp.ne.s32.totalorder %s253, %s269
      %p271 = scmp.eq.s32.totalorder %s25, 0
      %p272 = por %p270, %p271
      %p273 = scmp.le.s32.totalorder 1, %s19
      %p274 = scmp.lt.s32.totalorder %s19, 3
      %p275 = pnand %p273, %p274
      %p276 = pneg %p275
      // Predicated region
      $region9: #{tpu_custom_call.1} parent=5 // pred_check
        _
      $region10: #{tpu_custom_call.1} parent=5 // pred_check_branch
        %278 = sbr.rel (%p275) target = $region12
      $region11: #{tpu_custom_call.1} parent=5 // pred_region
        %s279 = ssub.s32 %s19, 1
        // Predicated region
        $region13: #{tpu_custom_call.1} parent=11 // pred_check
          %p280 = pneg %p92
        $region14: #{tpu_custom_call.1} parent=11 // pred_check_branch
          %282 = sbr.rel (%p280) target = $region16
        $region15: #{tpu_custom_call.1} parent=11 // pred_region
          _
        $region16: #{tpu_custom_call.1} parent=11 // pred_fallthru
          _
        // Predicated region
        $region17: #{tpu_custom_call.1} parent=11 // pred_check
          %p283 = pneg %p113
        $region18: #{tpu_custom_call.1} parent=11 // pred_check_branch
          %285 = sbr.rel (%p283) target = $region20
        $region19: #{tpu_custom_call.1} parent=11 // pred_region
          _
        $region20: #{tpu_custom_call.1} parent=11 // pred_fallthru
          _
        // Predicated region
        $region21: #{tpu_custom_call.1} parent=11 // pred_check
          %p286 = pneg %p134
        $region22: #{tpu_custom_call.1} parent=11 // pred_check_branch
          %288 = sbr.rel (%p286) target = $region24
        $region23: #{tpu_custom_call.1} parent=11 // pred_region
          _
        $region24: #{tpu_custom_call.1} parent=11 // pred_fallthru
          _
        // Predicated region
        $region25: #{tpu_custom_call.1} parent=11 // pred_check
          %p289 = pneg %p155
        $region26: #{tpu_custom_call.1} parent=11 // pred_check_branch
          %291 = sbr.rel (%p289) target = $region28
        $region27: #{tpu_custom_call.1} parent=11 // pred_region
          _
        $region28: #{tpu_custom_call.1} parent=11 // pred_fallthru
          _
        // Predicated region
        $region29: #{tpu_custom_call.1} parent=11 // pred_check
          %p292 = pneg %p176
        $region30: #{tpu_custom_call.1} parent=11 // pred_check_branch
          %294 = sbr.rel (%p292) target = $region32
        $region31: #{tpu_custom_call.1} parent=11 // pred_region
          _
        $region32: #{tpu_custom_call.1} parent=11 // pred_fallthru
          _
        // Predicated region
        $region33: #{tpu_custom_call.1} parent=11 // pred_check
          %p295 = pneg %p197
        $region34: #{tpu_custom_call.1} parent=11 // pred_check_branch
          %297 = sbr.rel (%p295) target = $region36
        $region35: #{tpu_custom_call.1} parent=11 // pred_region
          _
        $region36: #{tpu_custom_call.1} parent=11 // pred_fallthru
          _
        // Predicated region
        $region37: #{tpu_custom_call.1} parent=11 // pred_check
          %p298 = pneg %p218
        $region38: #{tpu_custom_call.1} parent=11 // pred_check_branch
          %300 = sbr.rel (%p298) target = $region40
        $region39: #{tpu_custom_call.1} parent=11 // pred_region
          _
        $region40: #{tpu_custom_call.1} parent=11 // pred_fallthru
          _
        // Predicated region
        $region41: #{tpu_custom_call.1} parent=11 // pred_check
          %p301 = pneg %p239
        $region42: #{tpu_custom_call.1} parent=11 // pred_check_branch
          %303 = sbr.rel (%p301) target = $region44
        $region43: #{tpu_custom_call.1} parent=11 // pred_region
          _
        $region44: #{tpu_custom_call.1} parent=11 // pred_fallthru
          _
      $region12: #{tpu_custom_call.1} parent=5 // pred_fallthru
        _
      %p304 = scmp.lt.s32.totalorder %s19, 2
      // Predicated region
      $region45: #{tpu_custom_call.1} parent=5 // pred_check
        %p305 = pneg %p304
      $region46: #{tpu_custom_call.1} parent=5 // pred_check_branch
        %307 = sbr.rel (%p305) target = $region48
      $region47: #{tpu_custom_call.1} parent=5 // pred_region
        // Predicated region
        $region49: #{tpu_custom_call.1} parent=47 // pred_check
          %p308 = pneg %p39
        $region50: #{tpu_custom_call.1} parent=47 // pred_check_branch
          %310 = sbr.rel (%p308) target = $region52
        $region51: #{tpu_custom_call.1} parent=47 // pred_region
          %p311 = scmp.lt.s32.totalorder %s19, 1
          %s312 = scalar_select %p311, %s19, 1
          %s313 = smul.addr %s312, 8
          %s314 = scalar_lea.vmem %s0, %s313
        $region52: #{tpu_custom_call.1} parent=47 // pred_fallthru
          _
        // Predicated region
        $region53: #{tpu_custom_call.1} parent=47 // pred_check
          %p315 = pneg %p65
        $region54: #{tpu_custom_call.1} parent=47 // pred_check_branch
          %317 = sbr.rel (%p315) target = $region56
        $region55: #{tpu_custom_call.1} parent=47 // pred_region
          %p318 = scmp.lt.s32.totalorder %s19, 1
          %s319 = scalar_select %p318, %s19, 1
          %s320 = smul.addr %s319, 8
          %s321 = scalar_lea.vmem %s1, %s320
        $region56: #{tpu_custom_call.1} parent=47 // pred_fallthru
          _
      $region48: #{tpu_custom_call.1} parent=5 // pred_fallthru
        _
      %p322 = scmp.le.s32.totalorder 1, %s19
      %p323 = scmp.lt.s32.totalorder %s19, 3
      %p324 = pnand %p322, %p323
      %p325 = pneg %p324
      // Predicated region
      $region57: #{tpu_custom_call.1} parent=5 // pred_check
        _
      $region58: #{tpu_custom_call.1} parent=5 // pred_check_branch
        %327 = sbr.rel (%p324) target = $region60
      $region59: #{tpu_custom_call.1} parent=5 // pred_region
        %s328 = ssub.s32 %s19, 1
        %p329 = scmp.lt.s32.totalorder %s24, 1
        %s330 = scalar_select %p329, %s24, 1
        %s331 = smul.addr %s330, 8
        %s332 = scalar_lea.vmem %s0, %s331
        %p333 = pneg %p45
        %p334 = pneg %p42
        %p335 = scmp.lt.s32.totalorder %s24, 1
        %s336 = scalar_select %p335, %s24, 1
        %s337 = smul.addr %s336, 8
        %s338 = scalar_lea.vmem %s1, %s337
        %p339 = pneg %p71
        %p340 = pneg %p68
        %p341 = pneg %p92
        %p342 = pneg %p89
        %p343 = pneg %p113
        %p344 = pneg %p110
        %p345 = pneg %p134
        %p346 = pneg %p131
        %p347 = pneg %p155
        %p348 = pneg %p152
        %p349 = pneg %p176
        %p350 = pneg %p173
        %p351 = pneg %p197
        %p352 = pneg %p194
        %p353 = pneg %p218
        %p354 = pneg %p215
        %p355 = pneg %p239
        %p356 = pneg %p236
        %p357 = pneg %p265
        %p358 = pneg %p262
        %s359 = sand.u32 %s252, 1
        %s360 = scalar_lea.sflag [#allocation3], %s359
        %s361 = sand.u32 %s252, 1
        %s362 = smul.addr %s361, 8
        %s363 = scalar_lea.vmem [#allocation2], %s362
        %p364 = scmp.lt.s32.totalorder %s24, 1
        %s365 = scalar_select %p364, %s24, 1
        %s366 = smul.addr %s365, 8
        %s367 = scalar_lea.vmem %s0, %s366
        %p368 = scmp.lt.s32.totalorder %s24, 1
        %s369 = scalar_select %p368, %s24, 1
        %s370 = smul.addr %s369, 8
        %s371 = scalar_lea.vmem %s1, %s370
        %v372 = vld [vmem:[%s367] sm:$0xff]
        %v373 = vld [vmem:[%s371] sm:$0xff]
        %vm374 = vcmask 64512
        %v376 = vsel %vm374, %v373, 0
        %378 = vmatprep.subr.mxu0 0.0
        %379 = vmatpush1.msra.mxu0 %v372
        %380 = vmatprep.subr.mxu0 0.0
        %381 = vmatpush1.msra.mxu0 0.0
        %382 = vmatprep.subr.mxu0 0.0
        %383 = vmatpush1.msra.mxu0 0.0
        %384 = vmatprep.subr.mxu0 0.0
        %385 = vmatpush1.msra.mxu0 0.0
        %386 = vmatprep.subr.mxu0 0.0
        %387 = vmatpush1.msra.mxu0 0.0
        %388 = vmatprep.subr.mxu0 0.0
        %389 = vmatpush1.msra.mxu0 0.0
        %390 = vmatprep.subr.mxu0 0.0
        %391 = vmatpush1.msra.mxu0 0.0
        %392 = vmatprep.subr.mxu0 0.0
        %393 = vmatpush1.msra.mxu0 0.0
        %394 = vmatprep.subr.mxu0 0.0
        %395 = vmatpush1.msra.mxu0 0.0
        %396 = vmatprep.subr.mxu0 0.0
        %397 = vmatpush1.msra.mxu0 0.0
        %398 = vmatprep.subr.mxu0 0.0
        %399 = vmatpush1.msra.mxu0 0.0
        %400 = vmatprep.subr.mxu0 0.0
        %401 = vmatpush1.msra.mxu0 0.0
        %402 = vmatprep.subr.mxu0 0.0
        %403 = vmatpush1.msra.mxu0 0.0
        %404 = vmatprep.subr.mxu0 0.0
        %405 = vmatpush1.msra.mxu0 0.0
        %406 = vmatprep.subr.mxu0 0.0
        %407 = vmatpush1.msra.mxu0 0.0
        %408 = vmatprep.subr.mxu0 0.0
        %409 = vmatpush1.msra.mxu0 0.0
        %410 = vmatprep.subr.mxu0 0.0
        %411 = vmatpush1.msra.mxu0 0.0
        %412 = vmatprep.subr.mxu0 0.0
        %413 = vmatpush1.msra.mxu0 0.0
        %414 = vmatprep.subr.mxu0 0.0
        %415 = vmatpush1.msra.mxu0 0.0
        %416 = vmatprep.subr.mxu0 0.0
        %417 = vmatpush1.msra.mxu0 0.0
        %418 = vmatprep.subr.mxu0 0.0
        %419 = vmatpush1.msra.mxu0 0.0
        %420 = vmatprep.subr.mxu0 0.0
        %421 = vmatpush1.msra.mxu0 0.0
        %422 = vmatprep.subr.mxu0 0.0
        %423 = vmatpush1.msra.mxu0 0.0
        %424 = vmatprep.subr.mxu0 0.0
        %425 = vmatpush1.msra.mxu0 0.0
        %426 = vmatprep.subr.mxu0 0.0
        %427 = vmatpush1.msra.mxu0 0.0
        %428 = vmatprep.subr.mxu0 0.0
        %429 = vmatpush1.msra.mxu0 0.0
        %430 = vmatprep.subr.mxu0 0.0
        %431 = vmatpush1.msra.mxu0 0.0
        %432 = vmatprep.subr.mxu0 0.0
        %433 = vmatpush1.msra.mxu0 0.0
        %434 = vmatprep.subr.mxu0 0.0
        %435 = vmatpush1.msra.mxu0 0.0
        %436 = vmatprep.subr.mxu0 0.0
        %437 = vmatpush1.msra.mxu0 0.0
        %438 = vmatprep.subr.mxu0 0.0
        %439 = vmatpush1.msra.mxu0 0.0
        %440 = vmatprep.subr.mxu0 0.0
        %441 = vmatpush1.msra.mxu0 0.0
        %442 = vmatprep.mubr.f32.mxu0 0.0
        %443 = vmatmul.mubr.f32.gmra.mrb[0].mxu0 %v376
        %v444 = vpop.f32.mrb[0].mxu0
        %v445 = vadd.f32 0.0, %v444
        %v446 = vpop.f32.mrb[0].mxu0
        %447 = vdwg.mxu0
        %v448 = vadd.f32 %v372, %v445
        %v449 = vld [vmem:[%s6] sm:$0x1]
        %v450 = vld [vmem:[%s7] sm:$0x1]
        %vm451 = vcmask 261120
        %v452 = vsel %vm451, %v448, 0.0
        %453 = vadd.xlane.f32.xlu0 %v452
        %v454 = vpop.xlane.xlu0 %453
        %v455 = vrcp.pop 32.0
        %v456 = vmul.f32 %v454, %v455
        %v457 = vsub.f32 %v448, %v456
        %v458 = vmul.f32 %v457, %v457
        %v459 = vsel %vm451, %v458, 0.0
        %460 = vadd.xlane.f32.xlu0 %v459
        %v461 = vpop.xlane.xlu0 %460
        %v462 = vmul.f32 %v461, 0.032258064
        %v463 = vrsqrt.pop %v462
        %v464 = vmul.f32 %v462, %v463
        %vm465 = vcmp.eq.f32.partialorder %v462, inf
        %v466 = vsel %vm465, %v462, %v464
        %vm467 = vcmp.eq.f32.partialorder %v462, 0.0
        %v468 = vand.u32 %v462, 2147483648
        %v469 = vsel %vm467, %v468, %v466
        %v470 = vadd.f32 %v469, 1e-06
        %v471 = vrcp.pop %v470
        %v473 = vlaneseq
        %v474 = vshrl.u32 %v473, 7
        %v475 = vsub.s32 0, %v474
        %v476 = vrot.slane %v449, %v475
        %v478 = vmul.f32 %v476, %v457
        %v479 = vmul.f32 %v478, %v471
        %v481 = vlaneseq
        %v482 = vshrl.u32 %v481, 7
        %v483 = vsub.s32 0, %v482
        %v484 = vrot.slane %v450, %v483
        %v486 = vadd.f32 %v479, %v484
        %v487 = vld [vmem:[%s2] sm:$0xff]
        %v488 = vld [vmem:[%s2 + $0x8] sm:$0xff]
        %v489 = vld [vmem:[%s2 + $0x10] sm:$0xff]
        %v490 = vld [vmem:[%s2 + $0x18] sm:$0xff]
        %v491 = vld [vmem:[%s3] sm:$0x1]
        %v493 = vlaneseq
        %v494 = vshrl.u32 %v493, 7
        %v495 = vsub.s32 0, %v494
        %v496 = vrot.slane %v491, %v495
        %v499 = vsel %vm451, %v486, 0
        %501 = vmatprep.subr.mxu0 0.0
        %502 = vmatpush1.msra.mxu0 %v487
        %503 = vmatprep.subr.mxu0 0.0
        %504 = vmatpush1.msra.mxu0 %v488
        %505 = vmatprep.subr.mxu0 0.0
        %506 = vmatpush1.msra.mxu0 %v489
        %507 = vmatprep.subr.mxu0 0.0
        %508 = vmatpush1.msra.mxu0 %v490
        %509 = vmatprep.subr.mxu0 0.0
        %510 = vmatpush1.msra.mxu0 0.0
        %511 = vmatprep.subr.mxu0 0.0
        %512 = vmatpush1.msra.mxu0 0.0
        %513 = vmatprep.subr.mxu0 0.0
        %514 = vmatpush1.msra.mxu0 0.0
        %515 = vmatprep.subr.mxu0 0.0
        %516 = vmatpush1.msra.mxu0 0.0
        %517 = vmatprep.subr.mxu0 0.0
        %518 = vmatpush1.msra.mxu0 0.0
        %519 = vmatprep.subr.mxu0 0.0
        %520 = vmatpush1.msra.mxu0 0.0
        %521 = vmatprep.subr.mxu0 0.0
        %522 = vmatpush1.msra.mxu0 0.0
        %523 = vmatprep.subr.mxu0 0.0
        %524 = vmatpush1.msra.mxu0 0.0
        %525 = vmatprep.subr.mxu0 0.0
        %526 = vmatpush1.msra.mxu0 0.0
        %527 = vmatprep.subr.mxu0 0.0
        %528 = vmatpush1.msra.mxu0 0.0
        %529 = vmatprep.subr.mxu0 0.0
        %530 = vmatpush1.msra.mxu0 0.0
        %531 = vmatprep.subr.mxu0 0.0
        %532 = vmatpush1.msra.mxu0 0.0
        %533 = vmatprep.subr.mxu0 0.0
        %534 = vmatpush1.msra.mxu0 0.0
        %535 = vmatprep.subr.mxu0 0.0
        %536 = vmatpush1.msra.mxu0 0.0
        %537 = vmatprep.subr.mxu0 0.0
        %538 = vmatpush1.msra.mxu0 0.0
        %539 = vmatprep.subr.mxu0 0.0
        %540 = vmatpush1.msra.mxu0 0.0
        %541 = vmatprep.subr.mxu0 0.0
        %542 = vmatpush1.msra.mxu0 0.0
        %543 = vmatprep.subr.mxu0 0.0
        %544 = vmatpush1.msra.mxu0 0.0
        %545 = vmatprep.subr.mxu0 0.0
        %546 = vmatpush1.msra.mxu0 0.0
        %547 = vmatprep.subr.mxu0 0.0
        %548 = vmatpush1.msra.mxu0 0.0
        %549 = vmatprep.subr.mxu0 0.0
        %550 = vmatpush1.msra.mxu0 0.0
        %551 = vmatprep.subr.mxu0 0.0
        %552 = vmatpush1.msra.mxu0 0.0
        %553 = vmatprep.subr.mxu0 0.0
        %554 = vmatpush1.msra.mxu0 0.0
        %555 = vmatprep.subr.mxu0 0.0
        %556 = vmatpush1.msra.mxu0 0.0
        %557 = vmatprep.subr.mxu0 0.0
        %558 = vmatpush1.msra.mxu0 0.0
        %559 = vmatprep.subr.mxu0 0.0
        %560 = vmatpush1.msra.mxu0 0.0
        %561 = vmatprep.subr.mxu0 0.0
        %562 = vmatpush1.msra.mxu0 0.0
        %563 = vmatprep.subr.mxu0 0.0
        %564 = vmatpush1.msra.mxu0 0.0
        %565 = vmatprep.mubr.f32.mxu0 0.0
        %566 = vmatmul.mubr.f32.gmra.mrb[0].mxu0 %v499
        %v567 = vpop.f32.mrb[0].mxu0
        %v568 = vadd.f32 %v496, %v567
        %v569 = vpop.f32.mrb[0].mxu0
        %570 = vdwg.mxu0
        %v571 = vmax.f32 %v568, 0.0
        %v572 = vld [vmem:[%s4] sm:$0xff]
        %v573 = vld [vmem:[%s4 + $0x8] sm:$0xff]
        %v574 = vld [vmem:[%s4 + $0x10] sm:$0xff]
        %v575 = vld [vmem:[%s4 + $0x18] sm:$0xff]
        %v576 = vld [vmem:[%s4 + $0x20] sm:$0xff]
        %v577 = vld [vmem:[%s4 + $0x28] sm:$0xff]
        %v578 = vld [vmem:[%s4 + $0x30] sm:$0xff]
        %v579 = vld [vmem:[%s4 + $0x38] sm:$0xff]
        %v580 = vld [vmem:[%s4 + $0x40] sm:$0xff]
        %v581 = vld [vmem:[%s4 + $0x48] sm:$0xff]
        %v582 = vld [vmem:[%s4 + $0x50] sm:$0xff]
        %v583 = vld [vmem:[%s4 + $0x58] sm:$0xff]
        %v584 = vld [vmem:[%s4 + $0x60] sm:$0xff]
        %v585 = vld [vmem:[%s4 + $0x68] sm:$0xff]
        %v586 = vld [vmem:[%s4 + $0x70] sm:$0xff]
        %v587 = vld [vmem:[%s4 + $0x78] sm:$0xff]
        %588 = vmatprep.subr.mxu0 0.0
        %589 = vmatpush1.msra.mxu0 %v572
        %590 = vmatprep.subr.mxu0 0.0
        %591 = vmatpush1.msra.mxu0 %v573
        %592 = vmatprep.subr.mxu0 0.0
        %593 = vmatpush1.msra.mxu0 %v574
        %594 = vmatprep.subr.mxu0 0.0
        %595 = vmatpush1.msra.mxu0 %v575
        %596 = vmatprep.subr.mxu0 0.0
        %597 = vmatpush1.msra.mxu0 %v576
        %598 = vmatprep.subr.mxu0 0.0
        %599 = vmatpush1.msra.mxu0 %v577
        %600 = vmatprep.subr.mxu0 0.0
        %601 = vmatpush1.msra.mxu0 %v578
        %602 = vmatprep.subr.mxu0 0.0
        %603 = vmatpush1.msra.mxu0 %v579
        %604 = vmatprep.subr.mxu0 0.0
        %605 = vmatpush1.msra.mxu0 %v580
        %606 = vmatprep.subr.mxu0 0.0
        %607 = vmatpush1.msra.mxu0 %v581
        %608 = vmatprep.subr.mxu0 0.0
        %609 = vmatpush1.msra.mxu0 %v582
        %610 = vmatprep.subr.mxu0 0.0
        %611 = vmatpush1.msra.mxu0 %v583
        %612 = vmatprep.subr.mxu0 0.0
        %613 = vmatpush1.msra.mxu0 %v584
        %614 = vmatprep.subr.mxu0 0.0
        %615 = vmatpush1.msra.mxu0 %v585
        %616 = vmatprep.subr.mxu0 0.0
        %617 = vmatpush1.msra.mxu0 %v586
        %618 = vmatprep.subr.mxu0 0.0
        %619 = vmatpush1.msra.mxu0 %v587
        %620 = vmatprep.subr.mxu0 0.0
        %621 = vmatpush1.msra.mxu0 0.0
        %622 = vmatprep.subr.mxu0 0.0
        %623 = vmatpush1.msra.mxu0 0.0
        %624 = vmatprep.subr.mxu0 0.0
        %625 = vmatpush1.msra.mxu0 0.0
        %626 = vmatprep.subr.mxu0 0.0
        %627 = vmatpush1.msra.mxu0 0.0
        %628 = vmatprep.subr.mxu0 0.0
        %629 = vmatpush1.msra.mxu0 0.0
        %630 = vmatprep.subr.mxu0 0.0
        %631 = vmatpush1.msra.mxu0 0.0
        %632 = vmatprep.subr.mxu0 0.0
        %633 = vmatpush1.msra.mxu0 0.0
        %634 = vmatprep.subr.mxu0 0.0
        %635 = vmatpush1.msra.mxu0 0.0
        %636 = vmatprep.subr.mxu0 0.0
        %637 = vmatpush1.msra.mxu0 0.0
        %638 = vmatprep.subr.mxu0 0.0
        %639 = vmatpush1.msra.mxu0 0.0
        %640 = vmatprep.subr.mxu0 0.0
        %641 = vmatpush1.msra.mxu0 0.0
        %642 = vmatprep.subr.mxu0 0.0
        %643 = vmatpush1.msra.mxu0 0.0
        %644 = vmatprep.subr.mxu0 0.0
        %645 = vmatpush1.msra.mxu0 0.0
        %646 = vmatprep.subr.mxu0 0.0
        %647 = vmatpush1.msra.mxu0 0.0
        %648 = vmatprep.subr.mxu0 0.0
        %649 = vmatpush1.msra.mxu0 0.0
        %650 = vmatprep.subr.mxu0 0.0
        %651 = vmatpush1.msra.mxu0 0.0
        %652 = vmatprep.mubr.f32.mxu0 0.0
        %653 = vmatmul.mubr.f32.gmra.mrb[0].mxu0 %v571
        %v654 = vpop.f32.mrb[0].mxu0
        %v655 = vadd.f32 0.0, %v654
        %v656 = vpop.f32.mrb[0].mxu0
        %657 = vdwg.mxu0
        %v658 = vadd.f32 %v486, %v655
        %v659 = vld [vmem:[%s5] sm:$0x1]
        %v661 = vlaneseq
        %v662 = vshrl.u32 %v661, 7
        %v663 = vsub.s32 0, %v662
        %v664 = vrot.slane %v659, %v663
        %v666 = vadd.f32 %v658, %v664
        %v667 = vld [vmem:[%s8] sm:$0x1]
        %v668 = vld [vmem:[%s9] sm:$0x1]
        %v669 = vsel %vm451, %v666, 0.0
        %670 = vadd.xlane.f32.xlu0 %v669
        %v671 = vpop.xlane.xlu0 %670
        %v672 = vmul.f32 %v671, %v455
        %v673 = vsub.f32 %v666, %v672
        %v674 = vmul.f32 %v673, %v673
        %v675 = vsel %vm451, %v674, 0.0
        %676 = vadd.xlane.f32.xlu0 %v675
        %v677 = vpop.xlane.xlu0 %676
        %v678 = vmul.f32 %v677, 0.032258064
        %v679 = vrsqrt.pop %v678
        %v680 = vmul.f32 %v678, %v679
        %vm681 = vcmp.eq.f32.partialorder %v678, inf
        %v682 = vsel %vm681, %v678, %v680
        %vm683 = vcmp.eq.f32.partialorder %v678, 0.0
        %v684 = vand.u32 %v678, 2147483648
        %v685 = vsel %vm683, %v684, %v682
        %v686 = vadd.f32 %v685, 1e-06
        %v687 = vrcp.pop %v686
        %v689 = vlaneseq
        %v690 = vshrl.u32 %v689, 7
        %v691 = vsub.s32 0, %v690
        %v692 = vrot.slane %v667, %v691
        %v694 = vmul.f32 %v692, %v673
        %v695 = vmul.f32 %v694, %v687
        %v697 = vlaneseq
        %v698 = vshrl.u32 %v697, 7
        %v699 = vsub.s32 0, %v698
        %v700 = vrot.slane %v668, %v699
        %v702 = vadd.f32 %v695, %v700
        %703 = vst.msk [vmem:[%s363] sm:$0xff] %vm451, %v702
        %s704 = sand.u32 %s252, 1
        %s705 = scalar_lea.sflag [#allocation3], %s704
        %s706 = sand.u32 %s252, 1
        %s707 = smul.addr %s706, 8
        %s708 = scalar_lea.vmem [#allocation2], %s707
        // Predicated region
        $region61: #{tpu_custom_call.1} parent=59 // pred_check
          %p709 = pneg %p262
        $region62: #{tpu_custom_call.1} parent=59 // pred_check_branch
          %711 = sbr.rel (%p709) target = $region64
        $region63: #{tpu_custom_call.1} parent=59 // pred_region
          %s713 = ssub.s32 128, 128
          %714 = vsyncadd %s705, %s713
          %s715 = smul.addr %s24, 128
          %s716 = scalar_lea.hbm %s10, %s715
          %s718 = sshll.u32 %s708, 4
          %s719 = int_to_ptr.vmem [resolvable:$true] %s718
          %721 = dma.vmem_to_hbm [thread:$0]  %s719, 128, %s716, %s705
        $region64: #{tpu_custom_call.1} parent=59 // pred_fallthru
          _
      $region60: #{tpu_custom_call.1} parent=5 // pred_fallthru
        _
      %p722 = scmp.le.s32.totalorder 2, %s19
      // Predicated region
      $region65: #{tpu_custom_call.1} parent=5 // pred_check
        %p723 = pneg %p722
      $region66: #{tpu_custom_call.1} parent=5 // pred_check_branch
        %725 = sbr.rel (%p723) target = $region68
      $region67: #{tpu_custom_call.1} parent=5 // pred_region
        %s726 = ssub.s32 %s19, 2
        // Predicated region
        $region69: #{tpu_custom_call.1} parent=67 // pred_check
          %p727 = pneg %p268
        $region70: #{tpu_custom_call.1} parent=67 // pred_check_branch
          %729 = sbr.rel (%p727) target = $region72
        $region71: #{tpu_custom_call.1} parent=67 // pred_region
          %s730 = sand.u32 %s253, 1
          %s731 = scalar_lea.sflag [#allocation3], %s730
          %s732 = sand.u32 %s253, 1
          %s733 = smul.addr %s732, 8
          %s734 = scalar_lea.vmem [#allocation2], %s733
          %735 = dma.done %s731, 128
        $region72: #{tpu_custom_call.1} parent=67 // pred_fallthru
          _
      $region68: #{tpu_custom_call.1} parent=5 // pred_fallthru
        _
    $region6: #{tpu_custom_call.1} parent=1 // loop_footer
      %s23 = sadd.s32 1, %s19
    $region7: #{tpu_custom_call.1} parent=1 // loop_footer_branch
      %18 = sbr.rel target = $region3
    $region8: #{tpu_custom_call.1} parent=1 // loop_exit
      _
    %736 = vsyncpa [#allocation3], 1
    %s737 = scalar_lea.sflag [#allocation3], 1
    %738 = vsyncpa %s737, 1

// kernel: tpu_custom_call.1
$region0: #{tpu_custom_call.1}
  #allocation0 [shape = 'u32[]', space=smem, size = 0x4, offset = 0x4, fixed_abs, tag = 'smem constant byte address 0x4 - core index']
  #allocation1 [shape = 'u32[144,128]{1,0:T(1,128)}', space=vmem, size = 0x12000, scoped, tag = 'internal scratch']
  %s0 = inlined_call_operand.vmem [shape: f32[2,8,32], index: 0, kind: input, shape index: {}]
  %s1 = inlined_call_operand.vmem [shape: f32[2,8,8], index: 1, kind: input, shape index: {}]
  %s2 = inlined_call_operand.vmem [shape: f32[32,128], index: 2, kind: input, shape index: {}]
  %s3 = inlined_call_operand.vmem [shape: f32[1,128], index: 3, kind: input, shape index: {}]
  %s4 = inlined_call_operand.vmem [shape: f32[128,32], index: 4, kind: input, shape index: {}]
  %s5 = inlined_call_operand.vmem [shape: f32[1,32], index: 5, kind: input, shape index: {}]
  %s6 = inlined_call_operand.vmem [shape: f32[1,32], index: 6, kind: input, shape index: {}]
  %s7 = inlined_call_operand.vmem [shape: f32[1,32], index: 7, kind: input, shape index: {}]
  %s8 = inlined_call_operand.vmem [shape: f32[1,32], index: 8, kind: input, shape index: {}]
  %s9 = inlined_call_operand.vmem [shape: f32[1,32], index: 9, kind: input, shape index: {}]
  %s10 = inlined_call_operand.hbm [shape: f32[2,8,32], index: 10, kind: output, shape index: {}]
  %s11 = sld [smem:[#allocation0]]
  $region73: #{tpu_custom_call.1} parent=0
    _
  %s13 = ssub.s32 1, %s11
  %s14 = scalar_select 0, %s13, %s11
  $region1: #{tpu_custom_call.1} parent=0
    #allocation2 [shape = 'u8[8192]{0}', space=vmem, size = 0x2000, scoped, tag = 'output window, operand 0']
    #allocation3 [shape = 's32[2]{0}', space=sflag, size = 0x8, scoped, tag = 'scoped memory for tpu_custom_call.1']
    %15 = vsyncpa [#allocation3], 0
    %s16 = scalar_lea.sflag [#allocation3], 1
    %17 = vsyncpa %s16, 0
    loop: start=0, step=1, limit=4
    $region2: #{tpu_custom_call.1} parent=1 // loop_pre_header
      _
    $region3: #{tpu_custom_call.1} parent=1 // loop_header
      %s19 = sphi 0, %s23
      %p20 = scmp.ge.s32.totalorder %s19, 4
      %s29 = sphi 0, %s31
      %s32 = sphi 0, %s29
      %s33 = sphi 0, %s32
      %s49 = sphi 0, %s33
      %s55 = sphi 0, %s57
      %s58 = sphi 0, %s55
      %s59 = sphi 0, %s58
      %s75 = sphi 0, %s59
      %s79 = sphi 0, %s79
      %s81 = sphi 0, %s79
      %s82 = sphi 0, %s81
      %s96 = sphi 0, %s82
      %s100 = sphi 0, %s100
      %s102 = sphi 0, %s100
      %s103 = sphi 0, %s102
      %s117 = sphi 0, %s103
      %s121 = sphi 0, %s121
      %s123 = sphi 0, %s121
      %s124 = sphi 0, %s123
      %s138 = sphi 0, %s124
      %s142 = sphi 0, %s142
      %s144 = sphi 0, %s142
      %s145 = sphi 0, %s144
      %s159 = sphi 0, %s145
      %s163 = sphi 0, %s163
      %s165 = sphi 0, %s163
      %s166 = sphi 0, %s165
      %s180 = sphi 0, %s166
      %s184 = sphi 0, %s184
      %s186 = sphi 0, %s184
      %s187 = sphi 0, %s186
      %s201 = sphi 0, %s187
      %s205 = sphi 0, %s205
      %s207 = sphi 0, %s205
      %s208 = sphi 0, %s207
      %s222 = sphi 0, %s208
      %s226 = sphi 0, %s226
      %s228 = sphi 0, %s226
      %s229 = sphi 0, %s228
      %s243 = sphi 0, %s229
      %s249 = sphi 0, %s251
      %s252 = sphi 0, %s249
      %s253 = sphi 0, %s252
      %s269 = sphi 0, %s253
    $region4: #{tpu_custom_call.1} parent=1 // loop_header_branch
      %22 = sbr.rel (%p20) target = $region8
    $region5: #{tpu_custom_call.1} parent=1 // loop_body
      %s24 = ssub.s32 %s19, 1
      %s25 = ssub.s32 %s19, 2
      %s26 = sadd.s32 %s19, 1
      %s27 = ssub.s32 %s19, %s26
      %p28 = scmp.eq.s32.totalorder %s27, 0
      %s30 = sadd.s32 %s29, 1
      %s31 = scalar_select %p28, %s29, %s30
      %p34 = pneg %p28
      %p35 = scmp.eq.s32.totalorder %s19, 1
      %p36 = por %p34, %p35
      %p37 = scmp.ne.s32.totalorder %s29, %s32
      %p38 = scmp.eq.s32.totalorder %s19, 0
      %p39 = por %p37, %p38
      %p40 = scmp.ne.s32.totalorder %s29, %s32
      %p41 = scmp.eq.s32.totalorder %s24, 1
      %p42 = por %p40, %p41
      %p43 = scmp.ne.s32.totalorder %s32, %s33
      %p44 = scmp.eq.s32.totalorder %s24, 0
      %p45 = por %p43, %p44
      %p46 = scmp.ne.s32.totalorder %s32, %s33
      %p47 = scmp.eq.s32.totalorder %s25, 1
      %p48 = por %p46, %p47
      %p50 = scmp.ne.s32.totalorder %s33, %s49
      %p51 = scmp.eq.s32.totalorder %s25, 0
      %p52 = por %p50, %p51
      %s53 = ssub.s32 %s19, %s26
      %p54 = scmp.eq.s32.totalorder %s53, 0
      %s56 = sadd.s32 %s55, 1
      %s57 = scalar_select %p54, %s55, %s56
      %p60 = pneg %p54
      %p61 = scmp.eq.s32.totalorder %s19, 1
      %p62 = por %p60, %p61
      %p63 = scmp.ne.s32.totalorder %s55, %s58
      %p64 = scmp.eq.s32.totalorder %s19, 0
      %p65 = por %p63, %p64
      %p66 = scmp.ne.s32.totalorder %s55, %s58
      %p67 = scmp.eq.s32.totalorder %s24, 1
      %p68 = por %p66, %p67
      %p69 = scmp.ne.s32.totalorder %s58, %s59
      %p70 = scmp.eq.s32.totalorder %s24, 0
      %p71 = por %p69, %p70
      %p72 = scmp.ne.s32.totalorder %s58, %s59
      %p73 = scmp.eq.s32.totalorder %s25, 1
      %p74 = por %p72, %p73
      %p76 = scmp.ne.s32.totalorder %s59, %s75
      %p77 = scmp.eq.s32.totalorder %s25, 0
      %p78 = por %p76, %p77
      %s80 = sadd.s32 %s79, 1
      %p83 = scmp.eq.s32.totalorder %s19, 1
      %p84 = scmp.ne.s32.totalorder %s79, %s81
      %p85 = scmp.eq.s32.totalorder %s19, 0
      %p86 = por %p84, %p85
      %p87 = scmp.ne.s32.totalorder %s79, %s81
      %p88 = scmp.eq.s32.totalorder %s24, 1
      %p89 = por %p87, %p88
      %p90 = scmp.ne.s32.totalorder %s81, %s82
      %p91 = scmp.eq.s32.totalorder %s24, 0
      %p92 = por %p90, %p91
      %p93 = scmp.ne.s32.totalorder %s81, %s82
      %p94 = scmp.eq.s32.totalorder %s25, 1
      %p95 = por %p93, %p94
      %p97 = scmp.ne.s32.totalorder %s82, %s96
      %p98 = scmp.eq.s32.totalorder %s25, 0
      %p99 = por %p97, %p98
      %s101 = sadd.s32 %s100, 1
      %p104 = scmp.eq.s32.totalorder %s19, 1
      %p105 = scmp.ne.s32.totalorder %s100, %s102
      %p106 = scmp.eq.s32.totalorder %s19, 0
      %p107 = por %p105, %p106
      %p108 = scmp.ne.s32.totalorder %s100, %s102
      %p109 = scmp.eq.s32.totalorder %s24, 1
      %p110 = por %p108, %p109
      %p111 = scmp.ne.s32.totalorder %s102, %s103
      %p112 = scmp.eq.s32.totalorder %s24, 0
      %p113 = por %p111, %p112
      %p114 = scmp.ne.s32.totalorder %s102, %s103
      %p115 = scmp.eq.s32.totalorder %s25, 1
      %p116 = por %p114, %p115
      %p118 = scmp.ne.s32.totalorder %s103, %s117
      %p119 = scmp.eq.s32.totalorder %s25, 0
      %p120 = por %p118, %p119
      %s122 = sadd.s32 %s121, 1
      %p125 = scmp.eq.s32.totalorder %s19, 1
      %p126 = scmp.ne.s32.totalorder %s121, %s123
      %p127 = scmp.eq.s32.totalorder %s19, 0
      %p128 = por %p126, %p127
      %p129 = scmp.ne.s32.totalorder %s121, %s123
      %p130 = scmp.eq.s32.totalorder %s24, 1
      %p131 = por %p129, %p130
      %p132 = scmp.ne.s32.totalorder %s123, %s124
      %p133 = scmp.eq.s32.totalorder %s24, 0
      %p134 = por %p132, %p133
      %p135 = scmp.ne.s32.totalorder %s123, %s124
      %p136 = scmp.eq.s32.totalorder %s25, 1
      %p137 = por %p135, %p136
      %p139 = scmp.ne.s32.totalorder %s124, %s138
      %p140 = scmp.eq.s32.totalorder %s25, 0
      %p141 = por %p139, %p140
      %s143 = sadd.s32 %s142, 1
      %p146 = scmp.eq.s32.totalorder %s19, 1
      %p147 = scmp.ne.s32.totalorder %s142, %s144
      %p148 = scmp.eq.s32.totalorder %s19, 0
      %p149 = por %p147, %p148
      %p150 = scmp.ne.s32.totalorder %s142, %s144
      %p151 = scmp.eq.s32.totalorder %s24, 1
      %p152 = por %p150, %p151
      %p153 = scmp.ne.s32.totalorder %s144, %s145
      %p154 = scmp.eq.s32.totalorder %s24, 0
      %p155 = por %p153, %p154
      %p156 = scmp.ne.s32.totalorder %s144, %s145
      %p157 = scmp.eq.s32.totalorder %s25, 1
      %p158 = por %p156, %p157
      %p160 = scmp.ne.s32.totalorder %s145, %s159
      %p161 = scmp.eq.s32.totalorder %s25, 0
      %p162 = por %p160, %p161
      %s164 = sadd.s32 %s163, 1
      %p167 = scmp.eq.s32.totalorder %s19, 1
      %p168 = scmp.ne.s32.totalorder %s163, %s165
      %p169 = scmp.eq.s32.totalorder %s19, 0
      %p170 = por %p168, %p169
      %p171 = scmp.ne.s32.totalorder %s163, %s165
      %p172 = scmp.eq.s32.totalorder %s24, 1
      %p173 = por %p171, %p172
      %p174 = scmp.ne.s32.totalorder %s165, %s166
      %p175 = scmp.eq.s32.totalorder %s24, 0
      %p176 = por %p174, %p175
      %p177 = scmp.ne.s32.totalorder %s165, %s166
      %p178 = scmp.eq.s32.totalorder %s25, 1
      %p179 = por %p177, %p178
      %p181 = scmp.ne.s32.totalorder %s166, %s180
      %p182 = scmp.eq.s32.totalorder %s25, 0
      %p183 = por %p181, %p182
      %s185 = sadd.s32 %s184, 1
      %p188 = scmp.eq.s32.totalorder %s19, 1
      %p189 = scmp.ne.s32.totalorder %s184, %s186
      %p190 = scmp.eq.s32.totalorder %s19, 0
      %p191 = por %p189, %p190
      %p192 = scmp.ne.s32.totalorder %s184, %s186
      %p193 = scmp.eq.s32.totalorder %s24, 1
      %p194 = por %p192, %p193
      %p195 = scmp.ne.s32.totalorder %s186, %s187
      %p196 = scmp.eq.s32.totalorder %s24, 0
      %p197 = por %p195, %p196
      %p198 = scmp.ne.s32.totalorder %s186, %s187
      %p199 = scmp.eq.s32.totalorder %s25, 1
      %p200 = por %p198, %p199
      %p202 = scmp.ne.s32.totalorder %s187, %s201
      %p203 = scmp.eq.s32.totalorder %s25, 0
      %p204 = por %p202, %p203
      %s206 = sadd.s32 %s205, 1
      %p209 = scmp.eq.s32.totalorder %s19, 1
      %p210 = scmp.ne.s32.totalorder %s205, %s207
      %p211 = scmp.eq.s32.totalorder %s19, 0
      %p212 = por %p210, %p211
      %p213 = scmp.ne.s32.totalorder %s205, %s207
      %p214 = scmp.eq.s32.totalorder %s24, 1
      %p215 = por %p213, %p214
      %p216 = scmp.ne.s32.totalorder %s207, %s208
      %p217 = scmp.eq.s32.totalorder %s24, 0
      %p218 = por %p216, %p217
      %p219 = scmp.ne.s32.totalorder %s207, %s208
      %p220 = scmp.eq.s32.totalorder %s25, 1
      %p221 = por %p219, %p220
      %p223 = scmp.ne.s32.totalorder %s208, %s222
      %p224 = scmp.eq.s32.totalorder %s25, 0
      %p225 = por %p223, %p224
      %s227 = sadd.s32 %s226, 1
      %p230 = scmp.eq.s32.totalorder %s19, 1
      %p231 = scmp.ne.s32.totalorder %s226, %s228
      %p232 = scmp.eq.s32.totalorder %s19, 0
      %p233 = por %p231, %p232
      %p234 = scmp.ne.s32.totalorder %s226, %s228
      %p235 = scmp.eq.s32.totalorder %s24, 1
      %p236 = por %p234, %p235
      %p237 = scmp.ne.s32.totalorder %s228, %s229
      %p238 = scmp.eq.s32.totalorder %s24, 0
      %p239 = por %p237, %p238
      %p240 = scmp.ne.s32.totalorder %s228, %s229
      %p241 = scmp.eq.s32.totalorder %s25, 1
      %p242 = por %p240, %p241
      %p244 = scmp.ne.s32.totalorder %s229, %s243
      %p245 = scmp.eq.s32.totalorder %s25, 0
      %p246 = por %p244, %p245
      %s247 = ssub.s32 %s19, %s26
      %p248 = scmp.eq.s32.totalorder %s247, 0
      %s250 = sadd.s32 %s249, 1
      %s251 = scalar_select %p248, %s249, %s250
      %p254 = pneg %p248
      %p255 = scmp.eq.s32.totalorder %s19, 1
      %p256 = por %p254, %p255
      %p257 = scmp.ne.s32.totalorder %s249, %s252
      %p258 = scmp.eq.s32.totalorder %s19, 0
      %p259 = por %p257, %p258
      %p260 = scmp.ne.s32.totalorder %s249, %s252
      %p261 = scmp.eq.s32.totalorder %s24, 1
      %p262 = por %p260, %p261
      %p263 = scmp.ne.s32.totalorder %s252, %s253
      %p264 = scmp.eq.s32.totalorder %s24, 0
      %p265 = por %p263, %p264
      %p266 = scmp.ne.s32.totalorder %s252, %s253
      %p267 = scmp.eq.s32.totalorder %s25, 1
      %p268 = por %p266, %p267
      %p270 = scmp.ne.s32.totalorder %s253, %s269
      %p271 = scmp.eq.s32.totalorder %s25, 0
      %p272 = por %p270, %p271
      %p273 = scmp.le.s32.totalorder 1, %s19
      %p274 = scmp.lt.s32.totalorder %s19, 3
      %p275 = pnand %p273, %p274
      %p276 = pneg %p275
      // Predicated region
      $region9: #{tpu_custom_call.1} parent=5 // pred_check
        _
      $region10: #{tpu_custom_call.1} parent=5 // pred_check_branch
        %278 = sbr.rel (%p275) target = $region12
      $region11: #{tpu_custom_call.1} parent=5 // pred_region
        %s279 = ssub.s32 %s19, 1
        // Predicated region
        $region13: #{tpu_custom_call.1} parent=11 // pred_check
          %p280 = pneg %p92
        $region14: #{tpu_custom_call.1} parent=11 // pred_check_branch
          %282 = sbr.rel (%p280) target = $region16
        $region15: #{tpu_custom_call.1} parent=11 // pred_region
          _
        $region16: #{tpu_custom_call.1} parent=11 // pred_fallthru
          _
        // Predicated region
        $region17: #{tpu_custom_call.1} parent=11 // pred_check
          %p283 = pneg %p113
        $region18: #{tpu_custom_call.1} parent=11 // pred_check_branch
          %285 = sbr.rel (%p283) target = $region20
        $region19: #{tpu_custom_call.1} parent=11 // pred_region
          _
        $region20: #{tpu_custom_call.1} parent=11 // pred_fallthru
          _
        // Predicated region
        $region21: #{tpu_custom_call.1} parent=11 // pred_check
          %p286 = pneg %p134
        $region22: #{tpu_custom_call.1} parent=11 // pred_check_branch
          %288 = sbr.rel (%p286) target = $region24
        $region23: #{tpu_custom_call.1} parent=11 // pred_region
          _
        $region24: #{tpu_custom_call.1} parent=11 // pred_fallthru
          _
        // Predicated region
        $region25: #{tpu_custom_call.1} parent=11 // pred_check
          %p289 = pneg %p155
        $region26: #{tpu_custom_call.1} parent=11 // pred_check_branch
          %291 = sbr.rel (%p289) target = $region28
        $region27: #{tpu_custom_call.1} parent=11 // pred_region
          _
        $region28: #{tpu_custom_call.1} parent=11 // pred_fallthru
          _
        // Predicated region
        $region29: #{tpu_custom_call.1} parent=11 // pred_check
          %p292 = pneg %p176
        $region30: #{tpu_custom_call.1} parent=11 // pred_check_branch
          %294 = sbr.rel (%p292) target = $region32
        $region31: #{tpu_custom_call.1} parent=11 // pred_region
          _
        $region32: #{tpu_custom_call.1} parent=11 // pred_fallthru
          _
        // Predicated region
        $region33: #{tpu_custom_call.1} parent=11 // pred_check
          %p295 = pneg %p197
        $region34: #{tpu_custom_call.1} parent=11 // pred_check_branch
          %297 = sbr.rel (%p295) target = $region36
        $region35: #{tpu_custom_call.1} parent=11 // pred_region
          _
        $region36: #{tpu_custom_call.1} parent=11 // pred_fallthru
          _
        // Predicated region
        $region37: #{tpu_custom_call.1} parent=11 // pred_check
          %p298 = pneg %p218
        $region38: #{tpu_custom_call.1} parent=11 // pred_check_branch
          %300 = sbr.rel (%p298) target = $region40
        $region39: #{tpu_custom_call.1} parent=11 // pred_region
          _
        $region40: #{tpu_custom_call.1} parent=11 // pred_fallthru
          _
        // Predicated region
        $region41: #{tpu_custom_call.1} parent=11 // pred_check
          %p301 = pneg %p239
        $region42: #{tpu_custom_call.1} parent=11 // pred_check_branch
          %303 = sbr.rel (%p301) target = $region44
        $region43: #{tpu_custom_call.1} parent=11 // pred_region
          _
        $region44: #{tpu_custom_call.1} parent=11 // pred_fallthru
          _
      $region12: #{tpu_custom_call.1} parent=5 // pred_fallthru
        _
      %p304 = scmp.lt.s32.totalorder %s19, 2
      // Predicated region
      $region45: #{tpu_custom_call.1} parent=5 // pred_check
        %p305 = pneg %p304
      $region46: #{tpu_custom_call.1} parent=5 // pred_check_branch
        %307 = sbr.rel (%p305) target = $region48
      $region47: #{tpu_custom_call.1} parent=5 // pred_region
        // Predicated region
        $region49: #{tpu_custom_call.1} parent=47 // pred_check
          %p308 = pneg %p39
        $region50: #{tpu_custom_call.1} parent=47 // pred_check_branch
          %310 = sbr.rel (%p308) target = $region52
        $region51: #{tpu_custom_call.1} parent=47 // pred_region
          %p311 = scmp.lt.s32.totalorder %s19, 1
          %s312 = scalar_select %p311, %s19, 1
          %s313 = smul.addr %s312, 8
          %s314 = scalar_lea.vmem %s0, %s313
        $region52: #{tpu_custom_call.1} parent=47 // pred_fallthru
          _
        // Predicated region
        $region53: #{tpu_custom_call.1} parent=47 // pred_check
          %p315 = pneg %p65
        $region54: #{tpu_custom_call.1} parent=47 // pred_check_branch
          %317 = sbr.rel (%p315) target = $region56
        $region55: #{tpu_custom_call.1} parent=47 // pred_region
          %p318 = scmp.lt.s32.totalorder %s19, 1
          %s319 = scalar_select %p318, %s19, 1
          %s320 = smul.addr %s319, 8
          %s321 = scalar_lea.vmem %s1, %s320
        $region56: #{tpu_custom_call.1} parent=47 // pred_fallthru
          _
      $region48: #{tpu_custom_call.1} parent=5 // pred_fallthru
        _
      %p322 = scmp.le.s32.totalorder 1, %s19
      %p323 = scmp.lt.s32.totalorder %s19, 3
      %p324 = pnand %p322, %p323
      %p325 = pneg %p324
      // Predicated region
      $region57: #{tpu_custom_call.1} parent=5 // pred_check
        _
      $region58: #{tpu_custom_call.1} parent=5 // pred_check_branch
        %327 = sbr.rel (%p324) target = $region60
      $region59: #{tpu_custom_call.1} parent=5 // pred_region
        %s328 = ssub.s32 %s19, 1
        %p329 = scmp.lt.s32.totalorder %s24, 1
        %s330 = scalar_select %p329, %s24, 1
        %s331 = smul.addr %s330, 8
        %s332 = scalar_lea.vmem %s0, %s331
        %p333 = pneg %p45
        %p334 = pneg %p42
        %p335 = scmp.lt.s32.totalorder %s24, 1
        %s336 = scalar_select %p335, %s24, 1
        %s337 = smul.addr %s336, 8
        %s338 = scalar_lea.vmem %s1, %s337
        %p339 = pneg %p71
        %p340 = pneg %p68
        %p341 = pneg %p92
        %p342 = pneg %p89
        %p343 = pneg %p113
        %p344 = pneg %p110
        %p345 = pneg %p134
        %p346 = pneg %p131
        %p347 = pneg %p155
        %p348 = pneg %p152
        %p349 = pneg %p176
        %p350 = pneg %p173
        %p351 = pneg %p197
        %p352 = pneg %p194
        %p353 = pneg %p218
        %p354 = pneg %p215
        %p355 = pneg %p239
        %p356 = pneg %p236
        %p357 = pneg %p265
        %p358 = pneg %p262
        %s359 = sand.u32 %s252, 1
        %s360 = scalar_lea.sflag [#allocation3], %s359
        %s361 = sand.u32 %s252, 1
        %s362 = smul.addr %s361, 8
        %s363 = scalar_lea.vmem [#allocation2], %s362
        %p364 = scmp.lt.s32.totalorder %s24, 1
        %s365 = scalar_select %p364, %s24, 1
        %s366 = smul.addr %s365, 8
        %s367 = scalar_lea.vmem %s0, %s366
        %p368 = scmp.lt.s32.totalorder %s24, 1
        %s369 = scalar_select %p368, %s24, 1
        %s370 = smul.addr %s369, 8
        %s371 = scalar_lea.vmem %s1, %s370
        %v372 = vld [vmem:[%s367] sm:$0xff]
        %v373 = vld [vmem:[%s371] sm:$0xff]
        %vm374 = vcmask 64512
        %v376 = vsel %vm374, %v373, 0
        %378 = vmatprep.subr.mxu0 0.0
        %379 = vmatpush1.msra.mxu0 %v372
        %380 = vmatprep.subr.mxu0 0.0
        %381 = vmatpush1.msra.mxu0 0.0
        %382 = vmatprep.subr.mxu0 0.0
        %383 = vmatpush1.msra.mxu0 0.0
        %384 = vmatprep.subr.mxu0 0.0
        %385 = vmatpush1.msra.mxu0 0.0
        %386 = vmatprep.subr.mxu0 0.0
        %387 = vmatpush1.msra.mxu0 0.0
        %388 = vmatprep.subr.mxu0 0.0
        %389 = vmatpush1.msra.mxu0 0.0
        %390 = vmatprep.subr.mxu0 0.0
        %391 = vmatpush1.msra.mxu0 0.0
        %392 = vmatprep.subr.mxu0 0.0
        %393 = vmatpush1.msra.mxu0 0.0
        %394 = vmatprep.subr.mxu0 0.0
        %395 = vmatpush1.msra.mxu0 0.0
        %396 = vmatprep.subr.mxu0 0.0
        %397 = vmatpush1.msra.mxu0 0.0
        %398 = vmatprep.subr.mxu0 0.0
        %399 = vmatpush1.msra.mxu0 0.0
        %400 = vmatprep.subr.mxu0 0.0
        %401 = vmatpush1.msra.mxu0 0.0
        %402 = vmatprep.subr.mxu0 0.0
        %403 = vmatpush1.msra.mxu0 0.0
        %404 = vmatprep.subr.mxu0 0.0
        %405 = vmatpush1.msra.mxu0 0.0
        %406 = vmatprep.subr.mxu0 0.0
        %407 = vmatpush1.msra.mxu0 0.0
        %408 = vmatprep.subr.mxu0 0.0
        %409 = vmatpush1.msra.mxu0 0.0
        %410 = vmatprep.subr.mxu0 0.0
        %411 = vmatpush1.msra.mxu0 0.0
        %412 = vmatprep.subr.mxu0 0.0
        %413 = vmatpush1.msra.mxu0 0.0
        %414 = vmatprep.subr.mxu0 0.0
        %415 = vmatpush1.msra.mxu0 0.0
        %416 = vmatprep.subr.mxu0 0.0
        %417 = vmatpush1.msra.mxu0 0.0
        %418 = vmatprep.subr.mxu0 0.0
        %419 = vmatpush1.msra.mxu0 0.0
        %420 = vmatprep.subr.mxu0 0.0
        %421 = vmatpush1.msra.mxu0 0.0
        %422 = vmatprep.subr.mxu0 0.0
        %423 = vmatpush1.msra.mxu0 0.0
        %424 = vmatprep.subr.mxu0 0.0
        %425 = vmatpush1.msra.mxu0 0.0
        %426 = vmatprep.subr.mxu0 0.0
        %427 = vmatpush1.msra.mxu0 0.0
        %428 = vmatprep.subr.mxu0 0.0
        %429 = vmatpush1.msra.mxu0 0.0
        %430 = vmatprep.subr.mxu0 0.0
        %431 = vmatpush1.msra.mxu0 0.0
        %432 = vmatprep.subr.mxu0 0.0
        %433 = vmatpush1.msra.mxu0 0.0
        %434 = vmatprep.subr.mxu0 0.0
        %435 = vmatpush1.msra.mxu0 0.0
        %436 = vmatprep.subr.mxu0 0.0
        %437 = vmatpush1.msra.mxu0 0.0
        %438 = vmatprep.subr.mxu0 0.0
        %439 = vmatpush1.msra.mxu0 0.0
        %440 = vmatprep.subr.mxu0 0.0
        %441 = vmatpush1.msra.mxu0 0.0
        %442 = vmatprep.mubr.f32.mxu0 0.0
        %443 = vmatmul.mubr.f32.gmra.mrb[0].mxu0 %v376
        %v444 = vpop.f32.mrb[0].mxu0
        %v445 = vadd.f32 0.0, %v444
        %v446 = vpop.f32.mrb[0].mxu0
        %447 = vdwg.mxu0
        %v448 = vadd.f32 %v372, %v445
        %v449 = vld [vmem:[%s6] sm:$0x1]
        %v450 = vld [vmem:[%s7] sm:$0x1]
        %vm451 = vcmask 261120
        %v452 = vsel %vm451, %v448, 0.0
        %453 = vadd.xlane.f32.xlu0 %v452
        %v454 = vpop.xlane.xlu0 %453
        %v455 = vrcp.pop 32.0
        %v456 = vmul.f32 %v454, %v455
        %v457 = vsub.f32 %v448, %v456
        %v458 = vmul.f32 %v457, %v457
        %v459 = vsel %vm451, %v458, 0.0
        %460 = vadd.xlane.f32.xlu0 %v459
        %v461 = vpop.xlane.xlu0 %460
        %v462 = vmul.f32 %v461, 0.032258064
        %v463 = vrsqrt.pop %v462
        %v464 = vmul.f32 %v462, %v463
        %vm465 = vcmp.eq.f32.partialorder %v462, inf
        %v466 = vsel %vm465, %v462, %v464
        %vm467 = vcmp.eq.f32.partialorder %v462, 0.0
        %v468 = vand.u32 %v462, 2147483648
        %v469 = vsel %vm467, %v468, %v466
        %v470 = vadd.f32 %v469, 1e-06
        %v471 = vrcp.pop %v470
        %v473 = vlaneseq
        %v474 = vshrl.u32 %v473, 7
        %v475 = vsub.s32 0, %v474
        %v476 = vrot.slane %v449, %v475
        %v478 = vmul.f32 %v476, %v457
        %v479 = vmul.f32 %v478, %v471
        %v481 = vlaneseq
        %v482 = vshrl.u32 %v481, 7
        %v483 = vsub.s32 0, %v482
        %v484 = vrot.slane %v450, %v483
        %v486 = vadd.f32 %v479, %v484
        %v487 = vld [vmem:[%s2] sm:$0xff]
        %v488 = vld [vmem:[%s2 + $0x8] sm:$0xff]
        %v489 = vld [vmem:[%s2 + $0x10] sm:$0xff]
        %v490 = vld [vmem:[%s2 + $0x18] sm:$0xff]
        %v491 = vld [vmem:[%s3] sm:$0x1]
        %v493 = vlaneseq
        %v494 = vshrl.u32 %v493, 7
        %v495 = vsub.s32 0, %v494
        %v496 = vrot.slane %v491, %v495
        %v499 = vsel %vm451, %v486, 0
        %501 = vmatprep.subr.mxu0 0.0
        %502 = vmatpush1.msra.mxu0 %v487
        %503 = vmatprep.subr.mxu0 0.0
        %504 = vmatpush1.msra.mxu0 %v488
        %505 = vmatprep.subr.mxu0 0.0
        %506 = vmatpush1.msra.mxu0 %v489
        %507 = vmatprep.subr.mxu0 0.0
        %508 = vmatpush1.msra.mxu0 %v490
        %509 = vmatprep.subr.mxu0 0.0
        %510 = vmatpush1.msra.mxu0 0.0
        %511 = vmatprep.subr.mxu0 0.0
        %512 = vmatpush1.msra.mxu0 0.0
        %513 = vmatprep.subr.mxu0 0.0
        %514 = vmatpush1.msra.mxu0 0.0
        %515 = vmatprep.subr.mxu0 0.0
        %516 = vmatpush1.msra.mxu0 0.0
        %517 = vmatprep.subr.mxu0 0.0
        %518 = vmatpush1.msra.mxu0 0.0
        %519 = vmatprep.subr.mxu0 0.0
        %520 = vmatpush1.msra.mxu0 0.0
        %521 = vmatprep.subr.mxu0 0.0
        %522 = vmatpush1.msra.mxu0 0.0
        %523 = vmatprep.subr.mxu0 0.0
        %524 = vmatpush1.msra.mxu0 0.0
        %525 = vmatprep.subr.mxu0 0.0
        %526 = vmatpush1.msra.mxu0 0.0
        %527 = vmatprep.subr.mxu0 0.0
        %528 = vmatpush1.msra.mxu0 0.0
        %529 = vmatprep.subr.mxu0 0.0
        %530 = vmatpush1.msra.mxu0 0.0
        %531 = vmatprep.subr.mxu0 0.0
        %532 = vmatpush1.msra.mxu0 0.0
        %533 = vmatprep.subr.mxu0 0.0
        %534 = vmatpush1.msra.mxu0 0.0
        %535 = vmatprep.subr.mxu0 0.0
        %536 = vmatpush1.msra.mxu0 0.0
        %537 = vmatprep.subr.mxu0 0.0
        %538 = vmatpush1.msra.mxu0 0.0
        %539 = vmatprep.subr.mxu0 0.0
        %540 = vmatpush1.msra.mxu0 0.0
        %541 = vmatprep.subr.mxu0 0.0
        %542 = vmatpush1.msra.mxu0 0.0
        %543 = vmatprep.subr.mxu0 0.0
        %544 = vmatpush1.msra.mxu0 0.0
        %545 = vmatprep.subr.mxu0 0.0
        %546 = vmatpush1.msra.mxu0 0.0
        %547 = vmatprep.subr.mxu0 0.0
        %548 = vmatpush1.msra.mxu0 0.0
        %549 = vmatprep.subr.mxu0 0.0
        %550 = vmatpush1.msra.mxu0 0.0
        %551 = vmatprep.subr.mxu0 0.0
        %552 = vmatpush1.msra.mxu0 0.0
        %553 = vmatprep.subr.mxu0 0.0
        %554 = vmatpush1.msra.mxu0 0.0
        %555 = vmatprep.subr.mxu0 0.0
        %556 = vmatpush1.msra.mxu0 0.0
        %557 = vmatprep.subr.mxu0 0.0
        %558 = vmatpush1.msra.mxu0 0.0
        %559 = vmatprep.subr.mxu0 0.0
        %560 = vmatpush1.msra.mxu0 0.0
        %561 = vmatprep.subr.mxu0 0.0
        %562 = vmatpush1.msra.mxu0 0.0
        %563 = vmatprep.subr.mxu0 0.0
        %564 = vmatpush1.msra.mxu0 0.0
        %565 = vmatprep.mubr.f32.mxu0 0.0
        %566 = vmatmul.mubr.f32.gmra.mrb[0].mxu0 %v499
        %v567 = vpop.f32.mrb[0].mxu0
        %v568 = vadd.f32 %v496, %v567
        %v569 = vpop.f32.mrb[0].mxu0
        %570 = vdwg.mxu0
        %v571 = vmax.f32 %v568, 0.0
        %v572 = vld [vmem:[%s4] sm:$0xff]
        %v573 = vld [vmem:[%s4 + $0x8] sm:$0xff]
        %v574 = vld [vmem:[%s4 + $0x10] sm:$0xff]
        %v575 = vld [vmem:[%s4 + $0x18] sm:$0xff]
        %v576 = vld [vmem:[%s4 + $0x20] sm:$0xff]
        %v577 = vld [vmem:[%s4 + $0x28] sm:$0xff]
        %v578 = vld [vmem:[%s4 + $0x30] sm:$0xff]
        %v579 = vld [vmem:[%s4 + $0x38] sm:$0xff]
        %v580 = vld [vmem:[%s4 + $0x40] sm:$0xff]
        %v581 = vld [vmem:[%s4 + $0x48] sm:$0xff]
        %v582 = vld [vmem:[%s4 + $0x50] sm:$0xff]
        %v583 = vld [vmem:[%s4 + $0x58] sm:$0xff]
        %v584 = vld [vmem:[%s4 + $0x60] sm:$0xff]
        %v585 = vld [vmem:[%s4 + $0x68] sm:$0xff]
        %v586 = vld [vmem:[%s4 + $0x70] sm:$0xff]
        %v587 = vld [vmem:[%s4 + $0x78] sm:$0xff]
        %588 = vmatprep.subr.mxu0 0.0
        %589 = vmatpush1.msra.mxu0 %v572
        %590 = vmatprep.subr.mxu0 0.0
        %591 = vmatpush1.msra.mxu0 %v573
        %592 = vmatprep.subr.mxu0 0.0
        %593 = vmatpush1.msra.mxu0 %v574
        %594 = vmatprep.subr.mxu0 0.0
        %595 = vmatpush1.msra.mxu0 %v575
        %596 = vmatprep.subr.mxu0 0.0
        %597 = vmatpush1.msra.mxu0 %v576
        %598 = vmatprep.subr.mxu0 0.0
        %599 = vmatpush1.msra.mxu0 %v577
        %600 = vmatprep.subr.mxu0 0.0
        %601 = vmatpush1.msra.mxu0 %v578
        %602 = vmatprep.subr.mxu0 0.0
        %603 = vmatpush1.msra.mxu0 %v579
        %604 = vmatprep.subr.mxu0 0.0
        %605 = vmatpush1.msra.mxu0 %v580
        %606 = vmatprep.subr.mxu0 0.0
        %607 = vmatpush1.msra.mxu0 %v581
        %608 = vmatprep.subr.mxu0 0.0
        %609 = vmatpush1.msra.mxu0 %v582
        %610 = vmatprep.subr.mxu0 0.0
        %611 = vmatpush1.msra.mxu0 %v583
        %612 = vmatprep.subr.mxu0 0.0
        %613 = vmatpush1.msra.mxu0 %v584
        %614 = vmatprep.subr.mxu0 0.0
        %615 = vmatpush1.msra.mxu0 %v585
        %616 = vmatprep.subr.mxu0 0.0
        %617 = vmatpush1.msra.mxu0 %v586
        %618 = vmatprep.subr.mxu0 0.0
        %619 = vmatpush1.msra.mxu0 %v587
        %620 = vmatprep.subr.mxu0 0.0
        %621 = vmatpush1.msra.mxu0 0.0
        %622 = vmatprep.subr.mxu0 0.0
        %623 = vmatpush1.msra.mxu0 0.0
        %624 = vmatprep.subr.mxu0 0.0
        %625 = vmatpush1.msra.mxu0 0.0
        %626 = vmatprep.subr.mxu0 0.0
        %627 = vmatpush1.msra.mxu0 0.0
        %628 = vmatprep.subr.mxu0 0.0
        %629 = vmatpush1.msra.mxu0 0.0
        %630 = vmatprep.subr.mxu0 0.0
        %631 = vmatpush1.msra.mxu0 0.0
        %632 = vmatprep.subr.mxu0 0.0
        %633 = vmatpush1.msra.mxu0 0.0
        %634 = vmatprep.subr.mxu0 0.0
        %635 = vmatpush1.msra.mxu0 0.0
        %636 = vmatprep.subr.mxu0 0.0
        %637 = vmatpush1.msra.mxu0 0.0
        %638 = vmatprep.subr.mxu0 0.0
        %639 = vmatpush1.msra.mxu0 0.0
        %640 = vmatprep.subr.mxu0 0.0
        %641 = vmatpush1.msra.mxu0 0.0
        %642 = vmatprep.subr.mxu0 0.0
        %643 = vmatpush1.msra.mxu0 0.0
        %644 = vmatprep.subr.mxu0 0.0
        %645 = vmatpush1.msra.mxu0 0.0
        %646 = vmatprep.subr.mxu0 0.0
        %647 = vmatpush1.msra.mxu0 0.0
        %648 = vmatprep.subr.mxu0 0.0
        %649 = vmatpush1.msra.mxu0 0.0
        %650 = vmatprep.subr.mxu0 0.0
        %651 = vmatpush1.msra.mxu0 0.0
        %652 = vmatprep.mubr.f32.mxu0 0.0
        %653 = vmatmul.mubr.f32.gmra.mrb[0].mxu0 %v571
        %v654 = vpop.f32.mrb[0].mxu0
        %v655 = vadd.f32 0.0, %v654
        %v656 = vpop.f32.mrb[0].mxu0
        %657 = vdwg.mxu0
        %v658 = vadd.f32 %v486, %v655
        %v659 = vld [vmem:[%s5] sm:$0x1]
        %v661 = vlaneseq
        %v662 = vshrl.u32 %v661, 7
        %v663 = vsub.s32 0, %v662
        %v664 = vrot.slane %v659, %v663
        %v666 = vadd.f32 %v658, %v664
        %v667 = vld [vmem:[%s8] sm:$0x1]
        %v668 = vld [vmem:[%s9] sm:$0x1]
        %v669 = vsel %vm451, %v666, 0.0
        %670 = vadd.xlane.f32.xlu0 %v669
        %v671 = vpop.xlane.xlu0 %670
        %v672 = vmul.f32 %v671, %v455
        %v673 = vsub.f32 %v666, %v672
        %v674 = vmul.f32 %v673, %v673
        %v675 = vsel %vm451, %v674, 0.0
        %676 = vadd.xlane.f32.xlu0 %v675
        %v677 = vpop.xlane.xlu0 %676
        %v678 = vmul.f32 %v677, 0.032258064
        %v679 = vrsqrt.pop %v678
        %v680 = vmul.f32 %v678, %v679
        %vm681 = vcmp.eq.f32.partialorder %v678, inf
        %v682 = vsel %vm681, %v678, %v680
        %vm683 = vcmp.eq.f32.partialorder %v678, 0.0
        %v684 = vand.u32 %v678, 2147483648
        %v685 = vsel %vm683, %v684, %v682
        %v686 = vadd.f32 %v685, 1e-06
        %v687 = vrcp.pop %v686
        %v689 = vlaneseq
        %v690 = vshrl.u32 %v689, 7
        %v691 = vsub.s32 0, %v690
        %v692 = vrot.slane %v667, %v691
        %v694 = vmul.f32 %v692, %v673
        %v695 = vmul.f32 %v694, %v687
        %v697 = vlaneseq
        %v698 = vshrl.u32 %v697, 7
        %v699 = vsub.s32 0, %v698
        %v700 = vrot.slane %v668, %v699
        %v702 = vadd.f32 %v695, %v700
        %703 = vst.msk [vmem:[%s363] sm:$0xff] %vm451, %v702
        %s704 = sand.u32 %s252, 1
        %s705 = scalar_lea.sflag [#allocation3], %s704
        %s706 = sand.u32 %s252, 1
        %s707 = smul.addr %s706, 8
        %s708 = scalar_lea.vmem [#allocation2], %s707
        // Predicated region
        $region61: #{tpu_custom_call.1} parent=59 // pred_check
          %p709 = pneg %p262
        $region62: #{tpu_custom_call.1} parent=59 // pred_check_branch
          %711 = sbr.rel (%p709) target = $region64
        $region63: #{tpu_custom_call.1} parent=59 // pred_region
          %s713 = ssub.s32 128, 128
          %714 = vsyncadd %s705, %s713
          %s715 = smul.addr %s24, 128
          %s716 = scalar_lea.hbm %s10, %s715
          %s718 = sshll.u32 %s708, 4
          %s719 = int_to_ptr.vmem [resolvable:$true] %s718
          %721 = dma.vmem_to_hbm [thread:$0]  %s719, 128, %s716, %s705
        $region64: #{tpu_custom_call.1} parent=59 // pred_fallthru
          _
      $region60: #{tpu_custom_call.1} parent=5 // pred_fallthru
        _
      %p722 = scmp.le.s32.totalorder 2, %s19
      // Predicated region
      $region65: #{tpu_custom_call.1} parent=5 // pred_check
        %p723 = pneg %p722
      $region66: #{tpu_custom_call.1} parent=5 // pred_check_branch
        %725 = sbr.rel (%p723) target = $region68
      $region67: #{tpu_custom_call.1} parent=5 // pred_region
        %s726 = ssub.s32 %s19, 2
        // Predicated region
        $region69: #{tpu_custom_call.1} parent=67 // pred_check
          %p727 = pneg %p268
        $region70: #{tpu_custom_call.1} parent=67 // pred_check_branch
          %729 = sbr.rel (%p727) target = $region72
        $region71: #{tpu_custom_call.1} parent=67 // pred_region
          %s730 = sand.u32 %s253, 1
          %s731 = scalar_lea.sflag [#allocation3], %s730
          %s732 = sand.u32 %s253, 1
          %s733 = smul.addr %s732, 8
          %s734 = scalar_lea.vmem [#allocation2], %s733
          %735 = dma.done %s731, 128
        $region72: #{tpu_custom_call.1} parent=67 // pred_fallthru
          _
      $region68: #{tpu_custom_call.1} parent=5 // pred_fallthru
        _
    $region6: #{tpu_custom_call.1} parent=1 // loop_footer
      %s23 = sadd.s32 1, %s19
    $region7: #{tpu_custom_call.1} parent=1 // loop_footer_branch
      %18 = sbr.rel target = $region3
    $region8: #{tpu_custom_call.1} parent=1 // loop_exit
      _
    %736 = vsyncpa [#allocation3], 1
    %s737 = scalar_lea.sflag [#allocation3], 1
    %738 = vsyncpa %s737, 1

</llo_original>
